<compile_context>
chip_gen: v7x
topology: tpu7x:2x2x1
jax: 0.10.0
libtpu: 0.0.40
codegen_flags: <defaults>
</compile_context>

<pallas_src>
import functools

import jax
import jax.numpy as jnp
from jax.experimental import pallas as pl
from jax.experimental.pallas import tpu as pltpu

HIDDEN = 768      # BERT hidden size (proj is 768 -> 69)
PROJ_DIM = 69
PROJ_PAD = 128    # lane-dense padded proj width
X_DIM = 59        # input_dim of TransMLP
X_PAD = 128       # lane-dense padded x width
SEQ = 8
BATCH = 2
VOCAB = 1000
FFN_DIM = 768     # shrunk surrogate FFN (real BERT uses 3072)

# Row offsets inside the packed 128-wide weight slab [1280, 128] (bf16):
#   wp : rows    0 ..  767   (768 x 128, cols 0..68 real)
#   w4 : rows  768 .. 1023   (256 x 128, cols 0..63 real)
#   w5 : rows 1024 .. 1151   (128 x 128, rows 0..63 / cols 0..15 real)
#   w6 : rows 1152 .. 1279   (128 x 128, rows 0..15 / cols 0..1  real)
# Packed 256-wide slab [768, 256] (bf16):
#   w1x: rows    0 ..  127   (x half of l1, rows 0..58 real)
#   w1h: rows  128 ..  255   (proj half of l1, rows 0..68 real)
#   w3 : rows  256 ..  767   (512 x 256)
# Packed 512-wide slab [256, 512] (bf16): w2
# Bias slab [8, 512] (f32): rows = bp, b1, b2, b3, b4, b5, b6, 0 (zero padded).


def _transmlp_head_kernel(x_ref, cls_ref, w128_ref, w256_ref, w512_ref,
                          bias_ref, out_ref):
    bf16 = jnp.bfloat16
    f32 = jnp.float32

    def mm(a, w):
        # bf16 operands on the MXU, f32 accumulation.
        return jnp.dot(a.astype(bf16), w, preferred_element_type=f32)

    # bert_proj = relu(proj(cls_hidden))             : [B,768] -> [B,128] (69 real)
    h = mm(cls_ref[...], w128_ref[0:768, :]) + bias_ref[0:1, 0:128]
    h = jnp.maximum(h, 0.0)

    # l1 over concat(x, bert_proj) as a split matmul (concat-free, lane aligned)
    a = (mm(x_ref[...], w256_ref[0:128, :])
         + mm(h, w256_ref[128:256, :])
         + bias_ref[1:2, 0:256])
    a = jnp.maximum(a, 0.0)                          # [B,256]

    a = mm(a, w512_ref[...]) + bias_ref[2:3, 0:512]  # l2: 256 -> 512
    a = jnp.maximum(a, 0.0)

    a = mm(a, w256_ref[256:768, :]) + bias_ref[3:4, 0:256]  # l3: 512 -> 256
    a = jnp.maximum(a, 0.0)

    a = mm(a, w128_ref[768:1024, :]) + bias_ref[4:5, 0:128]  # l4: 256 -> 128 (64 real)
    a = jnp.maximum(a, 0.0)

    a = mm(a, w128_ref[1024:1152, :]) + bias_ref[5:6, 0:128]  # l5: -> 128 (16 real)
    a = jnp.maximum(a, 0.0)

    # l6: -> 128 (2 real); lane-dense store, wrapper slices [:, :2]
    out_ref[...] = mm(a, w128_ref[1152:1280, :]) + bias_ref[6:7, 0:128]


def transmlp_head(x, cls_hidden, params):
    """proj + 6-layer MLP fully inside one Pallas kernel (everything in VMEM)."""
    B = x.shape[0]
    Bp = max(8, ((B + 7) // 8) * 8)                 # sublane-aligned batch

    x_pad = jnp.zeros((Bp, X_PAD), jnp.float32).at[:B, :X_DIM].set(x)
    cls_pad = jnp.zeros((Bp, HIDDEN), jnp.float32).at[:B, :].set(cls_hidden)

    flops_per_row = 2 * (768 * 128 + 2 * 128 * 256 + 256 * 512
                         + 512 * 256 + 256 * 128 + 2 * 128 * 128)
    weight_bytes = (1280 * 128 + 768 * 256 + 256 * 512) * 2 + 8 * 512 * 4
    act_bytes = Bp * (X_PAD + HIDDEN + 128) * 4
    cost = pl.CostEstimate(flops=flops_per_row * Bp, transcendentals=0,
                           bytes_accessed=weight_bytes + act_bytes)

    vmem = pl.BlockSpec(memory_space=pltpu.VMEM)
    out = pl.pallas_call(
        _transmlp_head_kernel,
        out_shape=jax.ShapeDtypeStruct((Bp, 128), jnp.float32),
        in_specs=[vmem] * 6,
        out_specs=vmem,
        cost_estimate=cost,
    )(x_pad, cls_pad, params["ws128"], params["ws256"], params["ws512"],
      params["bias_slab"])
    return out[:B, :2]


# ----------------------------------------------------------------------------
# Parameter init.  Master weights kept in f32 (for the reference path); the
# kernel consumes zero-padded, packed bf16 slabs.
# ----------------------------------------------------------------------------
def _pad_to(a, shape):
    out = jnp.zeros(shape, a.dtype)
    return out.at[tuple(slice(0, s) for s in a.shape)].set(a)


def init_params(key):
    ks = iter(jax.random.split(key, 32))

    def linear(in_f, out_f):
        w = jax.random.normal(next(ks), (in_f, out_f), jnp.float32) / jnp.sqrt(in_f)
        b = jax.random.normal(next(ks), (out_f,), jnp.float32) * 0.01
        return w, b

    p = {}
    p["wp"], p["bp"] = linear(HIDDEN, PROJ_DIM)      # proj: 768 -> 69
    p["w1"], p["b1"] = linear(X_DIM + PROJ_DIM, 256)  # l1: 128 -> 256
    p["w2"], p["b2"] = linear(256, 512)
    p["w3"], p["b3"] = linear(512, 256)
    p["w4"], p["b4"] = linear(256, 64)
    p["w5"], p["b5"] = linear(64, 16)
    p["w6"], p["b6"] = linear(16, 2)

    # --- packed, zero-padded, bf16 weight slabs -----------------------------
    wp_p = _pad_to(p["wp"], (768, 128))
    w1x_p = _pad_to(p["w1"][:X_DIM], (128, 256))     # x half of l1
    w1h_p = _pad_to(p["w1"][X_DIM:], (128, 256))     # bert_proj half of l1
    w4_p = _pad_to(p["w4"], (256, 128))
    w5_p = _pad_to(p["w5"], (128, 128))
    w6_p = _pad_to(p["w6"], (128, 128))

    p["ws128"] = jnp.concatenate([wp_p, w4_p, w5_p, w6_p], axis=0).astype(jnp.bfloat16)
    p["ws256"] = jnp.concatenate([w1x_p, w1h_p, p["w3"]], axis=0).astype(jnp.bfloat16)
    p["ws512"] = p["w2"].astype(jnp.bfloat16)

    bias = jnp.zeros((8, 512), jnp.float32)
    for row, b in enumerate([p["bp"], p["b1"], p["b2"], p["b3"],
                             p["b4"], p["b5"], p["b6"]]):
        bias = bias.at[row, :b.shape[0]].set(b)
    p["bias_slab"] = bias

    # --- surrogate encoder params -------------------------------------------
    std = 0.02
    p["tok_emb"] = jax.random.normal(next(ks), (VOCAB, HIDDEN), jnp.float32) * std
    p["pos_emb"] = jax.random.normal(next(ks), (SEQ, HIDDEN), jnp.float32) * std
    for name in ("wq", "wk", "wv", "wo"):
        p[name] = jax.random.normal(next(ks), (HIDDEN, HIDDEN), jnp.float32) * std
    p["wff1"] = jax.random.normal(next(ks), (HIDDEN, FFN_DIM), jnp.float32) * std
    p["wff2"] = jax.random.normal(next(ks), (FFN_DIM, HIDDEN), jnp.float32) * std
    return p


# ----------------------------------------------------------------------------
# Surrogate for BertModel(...)[0][:, 0, :]
# TODO(synk): the pretrained 12-layer bert-base-uncased encoder cannot be
# reproduced in-script; a deterministic single-layer masked-attention encoder
# stands in for it (same [B,S]->[B,768] CLS contract).
# ----------------------------------------------------------------------------
def synthetic_bert_cls(params, input_ids, attention_mask):
    emb = params["tok_emb"][input_ids] + params["pos_emb"][None, :, :]   # [B,S,H]
    q = emb @ params["wq"]
    k = emb @ params["wk"]
    v = emb @ params["wv"]
    scores = jnp.einsum("bqd,bkd->bqk", q, k) / jnp.sqrt(jnp.float32(HIDDEN))
    mask = attention_mask[:, None, :] > 0                                # [B,1,S]
    scores = jnp.where(mask, scores, jnp.float32(-1e9))
    attn = jax.nn.softmax(scores, axis=-1)
    h = emb + jnp.einsum("bqk,bkd->bqd", attn, v) @ params["wo"]
    h = h + jax.nn.gelu(h @ params["wff1"]) @ params["wff2"]
    return h[:, 0, :]                                                    # CLS: [B,768]


# Pure-JAX f32 reference of the head (true module semantics) for validation.
def transmlp_head_ref(x, cls_hidden, p):
    h = jax.nn.relu(cls_hidden @ p["wp"] + p["bp"])
    a = jnp.concatenate([x, h], axis=1)
    a = jax.nn.relu(a @ p["w1"] + p["b1"])
    a = jax.nn.relu(a @ p["w2"] + p["b2"])
    a = jax.nn.relu(a @ p["w3"] + p["b3"])
    a = jax.nn.relu(a @ p["w4"] + p["b4"])
    a = jax.nn.relu(a @ p["w5"] + p["b5"])
    return a @ p["w6"] + p["b6"]


@functools.partial(jax.jit, static_argnums=())
def transmlp_forward(params, x, input_ids, attention_mask):
    cls_hidden = synthetic_bert_cls(params, input_ids, attention_mask)
    return transmlp_head(x, cls_hidden, params)


if __name__ == "__main__":
    key = jax.random.PRNGKey(0)
    k_param, k_x, k_ids = jax.random.split(key, 3)

    params = init_params(k_param)
    x = jax.random.normal(k_x, (BATCH, X_DIM), jnp.float32)
    input_ids = jax.random.randint(k_ids, (BATCH, SEQ), 0, VOCAB, dtype=jnp.int32)
    attention_mask = jnp.ones((BATCH, SEQ), jnp.int32)

    out = transmlp_forward(params, x, input_ids, attention_mask)
    out = jax.block_until_ready(out)
    assert out.shape == (BATCH, 2) and out.dtype == jnp.float32

    # Relaxed-tolerance check vs the f32 reference (weights streamed as bf16).
    cls_hidden = synthetic_bert_cls(params, input_ids, attention_mask)
    ref = transmlp_head_ref(x, cls_hidden, params)
    assert jnp.allclose(out, ref, rtol=5e-2, atol=5e-2), (out, ref)

    print("KERNEL_OK")
</pallas_src>

<mosaic_0001>
module attributes {stable_mosaic.version = 11 : i64} {
  func.func @_transmlp_head_kernel(%arg0: memref<8x128xf32, #tpu.memory_space<vmem>>, %arg1: memref<8x768xf32, #tpu.memory_space<vmem>>, %arg2: memref<1280x128xbf16, #tpu.memory_space<vmem>>, %arg3: memref<768x256xbf16, #tpu.memory_space<vmem>>, %arg4: memref<256x512xbf16, #tpu.memory_space<vmem>>, %arg5: memref<8x512xf32, #tpu.memory_space<vmem>>, %arg6: memref<8x128xf32, #tpu.memory_space<vmem>>) attributes {dimension_semantics = [], scalar_prefetch = 0 : i64, scratch_operands = 0 : i64, tpu.core_type = #tpu.core_type<tc>} {
    %c0 = arith.constant 0 : index
    %c0_0 = arith.constant 0 : index
    %0 = vector.load %arg1[%c0, %c0_0] : memref<8x768xf32, #tpu.memory_space<vmem>>, vector<8x768xf32>
    %c0_1 = arith.constant 0 : index
    %c0_2 = arith.constant 0 : index
    %1 = vector.load %arg2[%c0_1, %c0_2] : memref<1280x128xbf16, #tpu.memory_space<vmem>>, vector<768x128xbf16>
    %2 = arith.truncf %0 : vector<8x768xf32> to vector<8x768xbf16>
    %cst = arith.constant dense<0.000000e+00> : vector<8x128xf32>
    %3 = tpu.matmul %2, %1, %cst {dimension_numbers = #tpu.dot_dimension_numbers<[1], [0], [0], [1], [0, 0, 1, 1], [], []>} : vector<8x768xbf16>, vector<768x128xbf16>, vector<8x128xf32> -> vector<8x128xf32>
    %c0_3 = arith.constant 0 : index
    %c0_4 = arith.constant 0 : index
    %4 = vector.load %arg5[%c0_3, %c0_4] : memref<8x512xf32, #tpu.memory_space<vmem>>, vector<1x128xf32>
    %5 = vector.broadcast %4 : vector<1x128xf32> to vector<8x128xf32>
    %6 = arith.addf %3, %5 : vector<8x128xf32>
    %cst_5 = arith.constant 0.000000e+00 : f32
    %7 = vector.broadcast %cst_5 : f32 to vector<8x128xf32>
    %8 = arith.maximumf %6, %7 : vector<8x128xf32>
    %c0_6 = arith.constant 0 : index
    %c0_7 = arith.constant 0 : index
    %9 = vector.load %arg0[%c0_6, %c0_7] : memref<8x128xf32, #tpu.memory_space<vmem>>, vector<8x128xf32>
    %c0_8 = arith.constant 0 : index
    %c0_9 = arith.constant 0 : index
    %10 = vector.load %arg3[%c0_8, %c0_9] : memref<768x256xbf16, #tpu.memory_space<vmem>>, vector<128x256xbf16>
    %11 = arith.truncf %9 : vector<8x128xf32> to vector<8x128xbf16>
    %cst_10 = arith.constant dense<0.000000e+00> : vector<8x256xf32>
    %12 = tpu.matmul %11, %10, %cst_10 {dimension_numbers = #tpu.dot_dimension_numbers<[1], [0], [0], [1], [0, 0, 1, 1], [], []>} : vector<8x128xbf16>, vector<128x256xbf16>, vector<8x256xf32> -> vector<8x256xf32>
    %c128 = arith.constant 128 : index
    %c0_11 = arith.constant 0 : index
    %13 = vector.load %arg3[%c128, %c0_11] : memref<768x256xbf16, #tpu.memory_space<vmem>>, vector<128x256xbf16>
    %14 = arith.truncf %8 : vector<8x128xf32> to vector<8x128xbf16>
    %cst_12 = arith.constant dense<0.000000e+00> : vector<8x256xf32>
    %15 = tpu.matmul %14, %13, %cst_12 {dimension_numbers = #tpu.dot_dimension_numbers<[1], [0], [0], [1], [0, 0, 1, 1], [], []>} : vector<8x128xbf16>, vector<128x256xbf16>, vector<8x256xf32> -> vector<8x256xf32>
    %16 = arith.addf %12, %15 : vector<8x256xf32>
    %c1 = arith.constant 1 : index
    %c0_13 = arith.constant 0 : index
    %17 = vector.load %arg5[%c1, %c0_13] : memref<8x512xf32, #tpu.memory_space<vmem>>, vector<1x256xf32>
    %18 = vector.broadcast %17 : vector<1x256xf32> to vector<8x256xf32>
    %19 = arith.addf %16, %18 : vector<8x256xf32>
    %cst_14 = arith.constant 0.000000e+00 : f32
    %20 = vector.broadcast %cst_14 : f32 to vector<8x256xf32>
    %21 = arith.maximumf %19, %20 : vector<8x256xf32>
    %c0_15 = arith.constant 0 : index
    %c0_16 = arith.constant 0 : index
    %22 = vector.load %arg4[%c0_15, %c0_16] : memref<256x512xbf16, #tpu.memory_space<vmem>>, vector<256x512xbf16>
    %23 = arith.truncf %21 : vector<8x256xf32> to vector<8x256xbf16>
    %cst_17 = arith.constant dense<0.000000e+00> : vector<8x512xf32>
    %24 = tpu.matmul %23, %22, %cst_17 {dimension_numbers = #tpu.dot_dimension_numbers<[1], [0], [0], [1], [0, 0, 1, 1], [], []>} : vector<8x256xbf16>, vector<256x512xbf16>, vector<8x512xf32> -> vector<8x512xf32>
    %c2 = arith.constant 2 : index
    %c0_18 = arith.constant 0 : index
    %25 = vector.load %arg5[%c2, %c0_18] : memref<8x512xf32, #tpu.memory_space<vmem>>, vector<1x512xf32>
    %26 = vector.broadcast %25 : vector<1x512xf32> to vector<8x512xf32>
    %27 = arith.addf %24, %26 : vector<8x512xf32>
    %cst_19 = arith.constant 0.000000e+00 : f32
    %28 = vector.broadcast %cst_19 : f32 to vector<8x512xf32>
    %29 = arith.maximumf %27, %28 : vector<8x512xf32>
    %c256 = arith.constant 256 : index
    %c0_20 = arith.constant 0 : index
    %30 = vector.load %arg3[%c256, %c0_20] : memref<768x256xbf16, #tpu.memory_space<vmem>>, vector<512x256xbf16>
    %31 = arith.truncf %29 : vector<8x512xf32> to vector<8x512xbf16>
    %cst_21 = arith.constant dense<0.000000e+00> : vector<8x256xf32>
    %32 = tpu.matmul %31, %30, %cst_21 {dimension_numbers = #tpu.dot_dimension_numbers<[1], [0], [0], [1], [0, 0, 1, 1], [], []>} : vector<8x512xbf16>, vector<512x256xbf16>, vector<8x256xf32> -> vector<8x256xf32>
    %c3 = arith.constant 3 : index
    %c0_22 = arith.constant 0 : index
    %33 = vector.load %arg5[%c3, %c0_22] : memref<8x512xf32, #tpu.memory_space<vmem>>, vector<1x256xf32>
    %34 = vector.broadcast %33 : vector<1x256xf32> to vector<8x256xf32>
    %35 = arith.addf %32, %34 : vector<8x256xf32>
    %cst_23 = arith.constant 0.000000e+00 : f32
    %36 = vector.broadcast %cst_23 : f32 to vector<8x256xf32>
    %37 = arith.maximumf %35, %36 : vector<8x256xf32>
    %c768 = arith.constant 768 : index
    %c0_24 = arith.constant 0 : index
    %38 = vector.load %arg2[%c768, %c0_24] : memref<1280x128xbf16, #tpu.memory_space<vmem>>, vector<256x128xbf16>
    %39 = arith.truncf %37 : vector<8x256xf32> to vector<8x256xbf16>
    %cst_25 = arith.constant dense<0.000000e+00> : vector<8x128xf32>
    %40 = tpu.matmul %39, %38, %cst_25 {dimension_numbers = #tpu.dot_dimension_numbers<[1], [0], [0], [1], [0, 0, 1, 1], [], []>} : vector<8x256xbf16>, vector<256x128xbf16>, vector<8x128xf32> -> vector<8x128xf32>
    %c4 = arith.constant 4 : index
    %c0_26 = arith.constant 0 : index
    %41 = vector.load %arg5[%c4, %c0_26] : memref<8x512xf32, #tpu.memory_space<vmem>>, vector<1x128xf32>
    %42 = vector.broadcast %41 : vector<1x128xf32> to vector<8x128xf32>
    %43 = arith.addf %40, %42 : vector<8x128xf32>
    %cst_27 = arith.constant 0.000000e+00 : f32
    %44 = vector.broadcast %cst_27 : f32 to vector<8x128xf32>
    %45 = arith.maximumf %43, %44 : vector<8x128xf32>
    %c1024 = arith.constant 1024 : index
    %c0_28 = arith.constant 0 : index
    %46 = vector.load %arg2[%c1024, %c0_28] : memref<1280x128xbf16, #tpu.memory_space<vmem>>, vector<128x128xbf16>
    %47 = arith.truncf %45 : vector<8x128xf32> to vector<8x128xbf16>
    %cst_29 = arith.constant dense<0.000000e+00> : vector<8x128xf32>
    %48 = tpu.matmul %47, %46, %cst_29 {dimension_numbers = #tpu.dot_dimension_numbers<[1], [0], [0], [1], [0, 0, 1, 1], [], []>} : vector<8x128xbf16>, vector<128x128xbf16>, vector<8x128xf32> -> vector<8x128xf32>
    %c5 = arith.constant 5 : index
    %c0_30 = arith.constant 0 : index
    %49 = vector.load %arg5[%c5, %c0_30] : memref<8x512xf32, #tpu.memory_space<vmem>>, vector<1x128xf32>
    %50 = vector.broadcast %49 : vector<1x128xf32> to vector<8x128xf32>
    %51 = arith.addf %48, %50 : vector<8x128xf32>
    %cst_31 = arith.constant 0.000000e+00 : f32
    %52 = vector.broadcast %cst_31 : f32 to vector<8x128xf32>
    %53 = arith.maximumf %51, %52 : vector<8x128xf32>
    %c1152 = arith.constant 1152 : index
    %c0_32 = arith.constant 0 : index
    %54 = vector.load %arg2[%c1152, %c0_32] : memref<1280x128xbf16, #tpu.memory_space<vmem>>, vector<128x128xbf16>
    %55 = arith.truncf %53 : vector<8x128xf32> to vector<8x128xbf16>
    %cst_33 = arith.constant dense<0.000000e+00> : vector<8x128xf32>
    %56 = tpu.matmul %55, %54, %cst_33 {dimension_numbers = #tpu.dot_dimension_numbers<[1], [0], [0], [1], [0, 0, 1, 1], [], []>} : vector<8x128xbf16>, vector<128x128xbf16>, vector<8x128xf32> -> vector<8x128xf32>
    %c6 = arith.constant 6 : index
    %c0_34 = arith.constant 0 : index
    %57 = vector.load %arg5[%c6, %c0_34] : memref<8x512xf32, #tpu.memory_space<vmem>>, vector<1x128xf32>
    %58 = vector.broadcast %57 : vector<1x128xf32> to vector<8x128xf32>
    %59 = arith.addf %56, %58 : vector<8x128xf32>
    %c0_35 = arith.constant 0 : index
    %c0_36 = arith.constant 0 : index
    %60 = vector.load %arg6[%c0_35, %c0_36] : memref<8x128xf32, #tpu.memory_space<vmem>>, vector<8x128xf32>
    tpu.vector_store %arg6[%c0_35, %c0_36], %59 {strides = array<i32>} : memref<8x128xf32, #tpu.memory_space<vmem>>, vector<8x128xf32>,
    return
  }
}

</mosaic_0001>

<llo_original>
// kernel: transmlp_forward.1
$region0: #{transmlp_forward.1}
  #allocation0 [shape = 'u32[]', space=smem, size = 0x4, offset = 0x4, fixed_abs, tag = 'smem constant byte address 0x4 - core index']
  #allocation1 [shape = 'u32[144,128]{1,0:T(1,128)}', space=vmem, size = 0x12000, scoped, tag = 'internal scratch']
  %s0 = inlined_call_operand.vmem [shape: f32[8,128], index: 0, kind: input, shape index: {}]
  %s1 = inlined_call_operand.vmem [shape: f32[8,768], index: 1, kind: input, shape index: {}]
  %s2 = inlined_call_operand.vmem [shape: bf16[1280,128], index: 2, kind: input, shape index: {}]
  %s3 = inlined_call_operand.vmem [shape: bf16[768,256], index: 3, kind: input, shape index: {}]
  %s4 = inlined_call_operand.vmem [shape: bf16[256,512], index: 4, kind: input, shape index: {}]
  %s5 = inlined_call_operand.vmem [shape: f32[8,512], index: 5, kind: input, shape index: {}]
  %s6 = inlined_call_operand.vmem [shape: f32[8,128], index: 6, kind: output, shape index: {}]
  %s7 = sld [smem:[#allocation0]]
  $region34: #{transmlp_forward.1} parent=0
    _
  %s9 = ssub.s32 1, %s7
  %s10 = scalar_select 0, %s9, %s7
  // Predicated region
  $region2: #{transmlp_forward.1} parent=0 // pred_check
    _
  $region3: #{transmlp_forward.1} parent=0 // pred_check_branch
    %12 = sbr.rel (0) target = $region5
  $region4: #{transmlp_forward.1} parent=0 // pred_region
    _
  $region5: #{transmlp_forward.1} parent=0 // pred_fallthru
    _
  // Predicated region
  $region6: #{transmlp_forward.1} parent=0 // pred_check
    _
  $region7: #{transmlp_forward.1} parent=0 // pred_check_branch
    %14 = sbr.rel (0) target = $region9
  $region8: #{transmlp_forward.1} parent=0 // pred_region
    _
  $region9: #{transmlp_forward.1} parent=0 // pred_fallthru
    _
  // Predicated region
  $region10: #{transmlp_forward.1} parent=0 // pred_check
    _
  $region11: #{transmlp_forward.1} parent=0 // pred_check_branch
    %16 = sbr.rel (0) target = $region13
  $region12: #{transmlp_forward.1} parent=0 // pred_region
    _
  $region13: #{transmlp_forward.1} parent=0 // pred_fallthru
    _
  // Predicated region
  $region14: #{transmlp_forward.1} parent=0 // pred_check
    _
  $region15: #{transmlp_forward.1} parent=0 // pred_check_branch
    %18 = sbr.rel (0) target = $region17
  $region16: #{transmlp_forward.1} parent=0 // pred_region
    _
  $region17: #{transmlp_forward.1} parent=0 // pred_fallthru
    _
  // Predicated region
  $region18: #{transmlp_forward.1} parent=0 // pred_check
    _
  $region19: #{transmlp_forward.1} parent=0 // pred_check_branch
    %20 = sbr.rel (0) target = $region21
  $region20: #{transmlp_forward.1} parent=0 // pred_region
    _
  $region21: #{transmlp_forward.1} parent=0 // pred_fallthru
    _
  // Predicated region
  $region22: #{transmlp_forward.1} parent=0 // pred_check
    _
  $region23: #{transmlp_forward.1} parent=0 // pred_check_branch
    %22 = sbr.rel (0) target = $region25
  $region24: #{transmlp_forward.1} parent=0 // pred_region
    _
  $region25: #{transmlp_forward.1} parent=0 // pred_fallthru
    _
  %v24 = vld [vmem:[%s1] sm:$0xff]
  %v25 = vld [vmem:[%s1 + $0x8] sm:$0xff]
  %v26 = vld [vmem:[%s1 + $0x10] sm:$0xff]
  %v27 = vld [vmem:[%s1 + $0x18] sm:$0xff]
  %v28 = vld [vmem:[%s1 + $0x20] sm:$0xff]
  %v29 = vld [vmem:[%s1 + $0x28] sm:$0xff]
  %v30 = vld [vmem:[%s2] sm:$0xf]
  %v31 = vld [vmem:[%s2 + $0x4] sm:$0xf]
  %v32 = vld [vmem:[%s2 + $0x8] sm:$0xf]
  %v33 = vld [vmem:[%s2 + $0xc] sm:$0xf]
  %v34 = vld [vmem:[%s2 + $0x10] sm:$0xf]
  %v35 = vld [vmem:[%s2 + $0x14] sm:$0xf]
  %v36 = vld [vmem:[%s2 + $0x18] sm:$0xf]
  %v37 = vld [vmem:[%s2 + $0x1c] sm:$0xf]
  %v38 = vld [vmem:[%s2 + $0x20] sm:$0xf]
  %v39 = vld [vmem:[%s2 + $0x24] sm:$0xf]
  %v40 = vld [vmem:[%s2 + $0x28] sm:$0xf]
  %v41 = vld [vmem:[%s2 + $0x2c] sm:$0xf]
  %v42 = vld [vmem:[%s2 + $0x30] sm:$0xf]
  %v43 = vld [vmem:[%s2 + $0x34] sm:$0xf]
  %v44 = vld [vmem:[%s2 + $0x38] sm:$0xf]
  %v45 = vld [vmem:[%s2 + $0x3c] sm:$0xf]
  %v46 = vld [vmem:[%s2 + $0x40] sm:$0xf]
  %v47 = vld [vmem:[%s2 + $0x44] sm:$0xf]
  %v48 = vld [vmem:[%s2 + $0x48] sm:$0xf]
  %v49 = vld [vmem:[%s2 + $0x4c] sm:$0xf]
  %v50 = vld [vmem:[%s2 + $0x50] sm:$0xf]
  %v51 = vld [vmem:[%s2 + $0x54] sm:$0xf]
  %v52 = vld [vmem:[%s2 + $0x58] sm:$0xf]
  %v53 = vld [vmem:[%s2 + $0x5c] sm:$0xf]
  %v54 = vld [vmem:[%s2 + $0x60] sm:$0xf]
  %v55 = vld [vmem:[%s2 + $0x64] sm:$0xf]
  %v56 = vld [vmem:[%s2 + $0x68] sm:$0xf]
  %v57 = vld [vmem:[%s2 + $0x6c] sm:$0xf]
  %v58 = vld [vmem:[%s2 + $0x70] sm:$0xf]
  %v59 = vld [vmem:[%s2 + $0x74] sm:$0xf]
  %v60 = vld [vmem:[%s2 + $0x78] sm:$0xf]
  %v61 = vld [vmem:[%s2 + $0x7c] sm:$0xf]
  %v62 = vld [vmem:[%s2 + $0x80] sm:$0xf]
  %v63 = vld [vmem:[%s2 + $0x84] sm:$0xf]
  %v64 = vld [vmem:[%s2 + $0x88] sm:$0xf]
  %v65 = vld [vmem:[%s2 + $0x8c] sm:$0xf]
  %v66 = vld [vmem:[%s2 + $0x90] sm:$0xf]
  %v67 = vld [vmem:[%s2 + $0x94] sm:$0xf]
  %v68 = vld [vmem:[%s2 + $0x98] sm:$0xf]
  %v69 = vld [vmem:[%s2 + $0x9c] sm:$0xf]
  %v70 = vld [vmem:[%s2 + $0xa0] sm:$0xf]
  %v71 = vld [vmem:[%s2 + $0xa4] sm:$0xf]
  %v72 = vld [vmem:[%s2 + $0xa8] sm:$0xf]
  %v73 = vld [vmem:[%s2 + $0xac] sm:$0xf]
  %v74 = vld [vmem:[%s2 + $0xb0] sm:$0xf]
  %v75 = vld [vmem:[%s2 + $0xb4] sm:$0xf]
  %v76 = vld [vmem:[%s2 + $0xb8] sm:$0xf]
  %v77 = vld [vmem:[%s2 + $0xbc] sm:$0xf]
  %v78 = vld [vmem:[%s2 + $0xc0] sm:$0xf]
  %v79 = vld [vmem:[%s2 + $0xc4] sm:$0xf]
  %v80 = vld [vmem:[%s2 + $0xc8] sm:$0xf]
  %v81 = vld [vmem:[%s2 + $0xcc] sm:$0xf]
  %v82 = vld [vmem:[%s2 + $0xd0] sm:$0xf]
  %v83 = vld [vmem:[%s2 + $0xd4] sm:$0xf]
  %v84 = vld [vmem:[%s2 + $0xd8] sm:$0xf]
  %v85 = vld [vmem:[%s2 + $0xdc] sm:$0xf]
  %v86 = vld [vmem:[%s2 + $0xe0] sm:$0xf]
  %v87 = vld [vmem:[%s2 + $0xe4] sm:$0xf]
  %v88 = vld [vmem:[%s2 + $0xe8] sm:$0xf]
  %v89 = vld [vmem:[%s2 + $0xec] sm:$0xf]
  %v90 = vld [vmem:[%s2 + $0xf0] sm:$0xf]
  %v91 = vld [vmem:[%s2 + $0xf4] sm:$0xf]
  %v92 = vld [vmem:[%s2 + $0xf8] sm:$0xf]
  %v93 = vld [vmem:[%s2 + $0xfc] sm:$0xf]
  %v94 = vld [vmem:[%s2 + $0x100] sm:$0xf]
  %v95 = vld [vmem:[%s2 + $0x104] sm:$0xf]
  %v96 = vld [vmem:[%s2 + $0x108] sm:$0xf]
  %v97 = vld [vmem:[%s2 + $0x10c] sm:$0xf]
  %v98 = vld [vmem:[%s2 + $0x110] sm:$0xf]
  %v99 = vld [vmem:[%s2 + $0x114] sm:$0xf]
  %v100 = vld [vmem:[%s2 + $0x118] sm:$0xf]
  %v101 = vld [vmem:[%s2 + $0x11c] sm:$0xf]
  %v102 = vld [vmem:[%s2 + $0x120] sm:$0xf]
  %v103 = vld [vmem:[%s2 + $0x124] sm:$0xf]
  %v104 = vld [vmem:[%s2 + $0x128] sm:$0xf]
  %v105 = vld [vmem:[%s2 + $0x12c] sm:$0xf]
  %v106 = vld [vmem:[%s2 + $0x130] sm:$0xf]
  %v107 = vld [vmem:[%s2 + $0x134] sm:$0xf]
  %v108 = vld [vmem:[%s2 + $0x138] sm:$0xf]
  %v109 = vld [vmem:[%s2 + $0x13c] sm:$0xf]
  %v110 = vld [vmem:[%s2 + $0x140] sm:$0xf]
  %v111 = vld [vmem:[%s2 + $0x144] sm:$0xf]
  %v112 = vld [vmem:[%s2 + $0x148] sm:$0xf]
  %v113 = vld [vmem:[%s2 + $0x14c] sm:$0xf]
  %v114 = vld [vmem:[%s2 + $0x150] sm:$0xf]
  %v115 = vld [vmem:[%s2 + $0x154] sm:$0xf]
  %v116 = vld [vmem:[%s2 + $0x158] sm:$0xf]
  %v117 = vld [vmem:[%s2 + $0x15c] sm:$0xf]
  %v118 = vld [vmem:[%s2 + $0x160] sm:$0xf]
  %v119 = vld [vmem:[%s2 + $0x164] sm:$0xf]
  %v120 = vld [vmem:[%s2 + $0x168] sm:$0xf]
  %v121 = vld [vmem:[%s2 + $0x16c] sm:$0xf]
  %v122 = vld [vmem:[%s2 + $0x170] sm:$0xf]
  %v123 = vld [vmem:[%s2 + $0x174] sm:$0xf]
  %v124 = vld [vmem:[%s2 + $0x178] sm:$0xf]
  %v125 = vld [vmem:[%s2 + $0x17c] sm:$0xf]
  %v126 = vpack.c.bf16 %v24, %v24
  %v127 = vpack.c.bf16 %v25, %v25
  %v128 = vpack.c.bf16 %v26, %v26
  %v129 = vpack.c.bf16 %v27, %v27
  %v130 = vpack.c.bf16 %v28, %v28
  %v131 = vpack.c.bf16 %v29, %v29
  %v132 = vld [vmem:[%s5] ss:$0 sm:$0xff]
  %v229 = vunpack.c.l.b16 %v30
  %v230 = vunpack.c.l.b16 %v31
  %v231 = vunpack.c.l.b16 %v32
  %v232 = vunpack.c.l.b16 %v33
  %v233 = vunpack.c.l.b16 %v34
  %v234 = vunpack.c.l.b16 %v35
  %v235 = vunpack.c.l.b16 %v36
  %v236 = vunpack.c.l.b16 %v37
  %v237 = vunpack.c.l.b16 %v38
  %v238 = vunpack.c.l.b16 %v39
  %v239 = vunpack.c.l.b16 %v40
  %v240 = vunpack.c.l.b16 %v41
  %v241 = vunpack.c.l.b16 %v42
  %v242 = vunpack.c.l.b16 %v43
  %v243 = vunpack.c.l.b16 %v44
  %v244 = vunpack.c.l.b16 %v45
  %v245 = vunpack.c.l.b16 %v46
  %v246 = vunpack.c.l.b16 %v47
  %v247 = vunpack.c.l.b16 %v48
  %v248 = vunpack.c.l.b16 %v49
  %v249 = vunpack.c.l.b16 %v50
  %v250 = vunpack.c.l.b16 %v51
  %v251 = vunpack.c.l.b16 %v52
  %v252 = vunpack.c.l.b16 %v53
  %v253 = vunpack.c.l.b16 %v54
  %v254 = vunpack.c.l.b16 %v55
  %v255 = vunpack.c.l.b16 %v56
  %v256 = vunpack.c.l.b16 %v57
  %v257 = vunpack.c.l.b16 %v58
  %v258 = vunpack.c.l.b16 %v59
  %v259 = vunpack.c.l.b16 %v60
  %v260 = vunpack.c.l.b16 %v61
  %v261 = vunpack.c.l.b16 %v62
  %v262 = vunpack.c.l.b16 %v63
  %v263 = vunpack.c.l.b16 %v64
  %v264 = vunpack.c.l.b16 %v65
  %v265 = vunpack.c.l.b16 %v66
  %v266 = vunpack.c.l.b16 %v67
  %v267 = vunpack.c.l.b16 %v68
  %v268 = vunpack.c.l.b16 %v69
  %v269 = vunpack.c.l.b16 %v70
  %v270 = vunpack.c.l.b16 %v71
  %v271 = vunpack.c.l.b16 %v72
  %v272 = vunpack.c.l.b16 %v73
  %v273 = vunpack.c.l.b16 %v74
  %v274 = vunpack.c.l.b16 %v75
  %v275 = vunpack.c.l.b16 %v76
  %v276 = vunpack.c.l.b16 %v77
  %v277 = vunpack.c.l.b16 %v78
  %v278 = vunpack.c.l.b16 %v79
  %v279 = vunpack.c.l.b16 %v80
  %v280 = vunpack.c.l.b16 %v81
  %v281 = vunpack.c.l.b16 %v82
  %v282 = vunpack.c.l.b16 %v83
  %v283 = vunpack.c.l.b16 %v84
  %v284 = vunpack.c.l.b16 %v85
  %v285 = vunpack.c.l.b16 %v86
  %v286 = vunpack.c.l.b16 %v87
  %v287 = vunpack.c.l.b16 %v88
  %v288 = vunpack.c.l.b16 %v89
  %v289 = vunpack.c.l.b16 %v90
  %v290 = vunpack.c.l.b16 %v91
  %v291 = vunpack.c.l.b16 %v92
  %v292 = vunpack.c.l.b16 %v93
  %v293 = vunpack.c.l.b16 %v94
  %v294 = vunpack.c.l.b16 %v95
  %v295 = vunpack.c.l.b16 %v96
  %v296 = vunpack.c.l.b16 %v97
  %v297 = vunpack.c.l.b16 %v98
  %v298 = vunpack.c.l.b16 %v99
  %v299 = vunpack.c.l.b16 %v100
  %v300 = vunpack.c.l.b16 %v101
  %v301 = vunpack.c.l.b16 %v102
  %v302 = vunpack.c.l.b16 %v103
  %v303 = vunpack.c.l.b16 %v104
  %v304 = vunpack.c.l.b16 %v105
  %v305 = vunpack.c.l.b16 %v106
  %v306 = vunpack.c.l.b16 %v107
  %v307 = vunpack.c.l.b16 %v108
  %v308 = vunpack.c.l.b16 %v109
  %v309 = vunpack.c.l.b16 %v110
  %v310 = vunpack.c.l.b16 %v111
  %v311 = vunpack.c.l.b16 %v112
  %v312 = vunpack.c.l.b16 %v113
  %v313 = vunpack.c.l.b16 %v114
  %v314 = vunpack.c.l.b16 %v115
  %v315 = vunpack.c.l.b16 %v116
  %v316 = vunpack.c.l.b16 %v117
  %v317 = vunpack.c.l.b16 %v118
  %v318 = vunpack.c.l.b16 %v119
  %v319 = vunpack.c.l.b16 %v120
  %v320 = vunpack.c.l.b16 %v121
  %v321 = vunpack.c.l.b16 %v122
  %v322 = vunpack.c.l.b16 %v123
  %v323 = vunpack.c.l.b16 %v124
  %v324 = vunpack.c.l.b16 %v125
  %v325 = vpack.c.b16 %v230, %v229
  %v326 = vpack.c.b16 %v232, %v231
  %v327 = vpack.c.b16 %v234, %v233
  %v328 = vpack.c.b16 %v236, %v235
  %v329 = vpack.c.b16 %v238, %v237
  %v330 = vpack.c.b16 %v240, %v239
  %v331 = vpack.c.b16 %v242, %v241
  %v332 = vpack.c.b16 %v244, %v243
  %v333 = vpack.c.b16 %v246, %v245
  %v334 = vpack.c.b16 %v248, %v247
  %v335 = vpack.c.b16 %v250, %v249
  %v336 = vpack.c.b16 %v252, %v251
  %v337 = vpack.c.b16 %v254, %v253
  %v338 = vpack.c.b16 %v256, %v255
  %v339 = vpack.c.b16 %v258, %v257
  %v340 = vpack.c.b16 %v260, %v259
  %v341 = vpack.c.b16 %v262, %v261
  %v342 = vpack.c.b16 %v264, %v263
  %v343 = vpack.c.b16 %v266, %v265
  %v344 = vpack.c.b16 %v268, %v267
  %v345 = vpack.c.b16 %v270, %v269
  %v346 = vpack.c.b16 %v272, %v271
  %v347 = vpack.c.b16 %v274, %v273
  %v348 = vpack.c.b16 %v276, %v275
  %v349 = vpack.c.b16 %v278, %v277
  %v350 = vpack.c.b16 %v280, %v279
  %v351 = vpack.c.b16 %v282, %v281
  %v352 = vpack.c.b16 %v284, %v283
  %v353 = vpack.c.b16 %v286, %v285
  %v354 = vpack.c.b16 %v288, %v287
  %v355 = vpack.c.b16 %v290, %v289
  %v356 = vpack.c.b16 %v292, %v291
  %v357 = vpack.c.b16 %v294, %v293
  %v358 = vpack.c.b16 %v296, %v295
  %v359 = vpack.c.b16 %v298, %v297
  %v360 = vpack.c.b16 %v300, %v299
  %v361 = vpack.c.b16 %v302, %v301
  %v362 = vpack.c.b16 %v304, %v303
  %v363 = vpack.c.b16 %v306, %v305
  %v364 = vpack.c.b16 %v308, %v307
  %v365 = vpack.c.b16 %v310, %v309
  %v366 = vpack.c.b16 %v312, %v311
  %v367 = vpack.c.b16 %v314, %v313
  %v368 = vpack.c.b16 %v316, %v315
  %v369 = vpack.c.b16 %v318, %v317
  %v370 = vpack.c.b16 %v320, %v319
  %v371 = vpack.c.b16 %v322, %v321
  %v372 = vpack.c.b16 %v324, %v323
  %421 = vmatprep.subr.bf16.mxu0 0
  %422 = vmatpush1.bf16.msra.mxu0 %v325
  %423 = vmatprep.subr.bf16.mxu0 0
  %424 = vmatpush1.bf16.msra.mxu0 %v326
  %425 = vmatprep.subr.bf16.mxu0 0
  %426 = vmatpush1.bf16.msra.mxu0 %v327
  %427 = vmatprep.subr.bf16.mxu0 0
  %428 = vmatpush1.bf16.msra.mxu0 %v328
  %429 = vmatprep.subr.bf16.mxu0 0
  %430 = vmatpush1.bf16.msra.mxu0 %v329
  %431 = vmatprep.subr.bf16.mxu0 0
  %432 = vmatpush1.bf16.msra.mxu0 %v330
  %433 = vmatprep.subr.bf16.mxu0 0
  %434 = vmatpush1.bf16.msra.mxu0 %v331
  %435 = vmatprep.subr.bf16.mxu0 0
  %436 = vmatpush1.bf16.msra.mxu0 %v332
  %437 = vmatprep.subr.bf16.mxu0 0
  %438 = vmatpush1.bf16.msra.mxu0 %v333
  %439 = vmatprep.subr.bf16.mxu0 0
  %440 = vmatpush1.bf16.msra.mxu0 %v334
  %441 = vmatprep.subr.bf16.mxu0 0
  %442 = vmatpush1.bf16.msra.mxu0 %v335
  %443 = vmatprep.subr.bf16.mxu0 0
  %444 = vmatpush1.bf16.msra.mxu0 %v336
  %445 = vmatprep.subr.bf16.mxu0 0
  %446 = vmatpush1.bf16.msra.mxu0 %v337
  %447 = vmatprep.subr.bf16.mxu0 0
  %448 = vmatpush1.bf16.msra.mxu0 %v338
  %449 = vmatprep.subr.bf16.mxu0 0
  %450 = vmatpush1.bf16.msra.mxu0 %v339
  %451 = vmatprep.subr.bf16.mxu0 0
  %452 = vmatpush1.bf16.msra.mxu0 %v340
  %453 = vmatprep.mubr.bf16.mxu0 %v127
  %454 = vmatmul.mubr.bf16.gmra.mrb[0].mxu0 %v126
  %v455 = vpop.f32.mrb[0].mxu0
  %v456 = vadd.f32 %v132, %v455
  %v457 = vpop.f32.mrb[0].mxu0
  %v458 = vpop.f32.mrb[0].mxu0
  %v459 = vpop.f32.mrb[0].mxu0
  %460 = vdwg.mxu0
  %461 = vmatprep.subr.bf16.mxu0 0
  %462 = vmatpush1.bf16.msra.mxu0 %v341
  %463 = vmatprep.subr.bf16.mxu0 0
  %464 = vmatpush1.bf16.msra.mxu0 %v342
  %465 = vmatprep.subr.bf16.mxu0 0
  %466 = vmatpush1.bf16.msra.mxu0 %v343
  %467 = vmatprep.subr.bf16.mxu0 0
  %468 = vmatpush1.bf16.msra.mxu0 %v344
  %469 = vmatprep.subr.bf16.mxu0 0
  %470 = vmatpush1.bf16.msra.mxu0 %v345
  %471 = vmatprep.subr.bf16.mxu0 0
  %472 = vmatpush1.bf16.msra.mxu0 %v346
  %473 = vmatprep.subr.bf16.mxu0 0
  %474 = vmatpush1.bf16.msra.mxu0 %v347
  %475 = vmatprep.subr.bf16.mxu0 0
  %476 = vmatpush1.bf16.msra.mxu0 %v348
  %477 = vmatprep.subr.bf16.mxu0 0
  %478 = vmatpush1.bf16.msra.mxu0 %v349
  %479 = vmatprep.subr.bf16.mxu0 0
  %480 = vmatpush1.bf16.msra.mxu0 %v350
  %481 = vmatprep.subr.bf16.mxu0 0
  %482 = vmatpush1.bf16.msra.mxu0 %v351
  %483 = vmatprep.subr.bf16.mxu0 0
  %484 = vmatpush1.bf16.msra.mxu0 %v352
  %485 = vmatprep.subr.bf16.mxu0 0
  %486 = vmatpush1.bf16.msra.mxu0 %v353
  %487 = vmatprep.subr.bf16.mxu0 0
  %488 = vmatpush1.bf16.msra.mxu0 %v354
  %489 = vmatprep.subr.bf16.mxu0 0
  %490 = vmatpush1.bf16.msra.mxu0 %v355
  %491 = vmatprep.subr.bf16.mxu0 0
  %492 = vmatpush1.bf16.msra.mxu0 %v356
  %493 = vmatprep.mubr.bf16.mxu0 %v129
  %494 = vmatmul.mubr.bf16.gmra.mrb[0].mxu0 %v128
  %v495 = vpop.f32.mrb[0].mxu0
  %v496 = vadd.f32 %v456, %v495
  %v497 = vpop.f32.mrb[0].mxu0
  %v498 = vpop.f32.mrb[0].mxu0
  %v499 = vpop.f32.mrb[0].mxu0
  %500 = vdwg.mxu0
  %501 = vmatprep.subr.bf16.mxu0 0
  %502 = vmatpush1.bf16.msra.mxu0 %v357
  %503 = vmatprep.subr.bf16.mxu0 0
  %504 = vmatpush1.bf16.msra.mxu0 %v358
  %505 = vmatprep.subr.bf16.mxu0 0
  %506 = vmatpush1.bf16.msra.mxu0 %v359
  %507 = vmatprep.subr.bf16.mxu0 0
  %508 = vmatpush1.bf16.msra.mxu0 %v360
  %509 = vmatprep.subr.bf16.mxu0 0
  %510 = vmatpush1.bf16.msra.mxu0 %v361
  %511 = vmatprep.subr.bf16.mxu0 0
  %512 = vmatpush1.bf16.msra.mxu0 %v362
  %513 = vmatprep.subr.bf16.mxu0 0
  %514 = vmatpush1.bf16.msra.mxu0 %v363
  %515 = vmatprep.subr.bf16.mxu0 0
  %516 = vmatpush1.bf16.msra.mxu0 %v364
  %517 = vmatprep.subr.bf16.mxu0 0
  %518 = vmatpush1.bf16.msra.mxu0 %v365
  %519 = vmatprep.subr.bf16.mxu0 0
  %520 = vmatpush1.bf16.msra.mxu0 %v366
  %521 = vmatprep.subr.bf16.mxu0 0
  %522 = vmatpush1.bf16.msra.mxu0 %v367
  %523 = vmatprep.subr.bf16.mxu0 0
  %524 = vmatpush1.bf16.msra.mxu0 %v368
  %525 = vmatprep.subr.bf16.mxu0 0
  %526 = vmatpush1.bf16.msra.mxu0 %v369
  %527 = vmatprep.subr.bf16.mxu0 0
  %528 = vmatpush1.bf16.msra.mxu0 %v370
  %529 = vmatprep.subr.bf16.mxu0 0
  %530 = vmatpush1.bf16.msra.mxu0 %v371
  %531 = vmatprep.subr.bf16.mxu0 0
  %532 = vmatpush1.bf16.msra.mxu0 %v372
  %533 = vmatprep.mubr.bf16.mxu0 %v131
  %534 = vmatmul.mubr.bf16.gmra.mrb[0].mxu0 %v130
  %v535 = vpop.f32.mrb[0].mxu0
  %v536 = vadd.f32 %v496, %v535
  %v537 = vpop.f32.mrb[0].mxu0
  %v538 = vpop.f32.mrb[0].mxu0
  %v539 = vpop.f32.mrb[0].mxu0
  %540 = vdwg.mxu0
  %v541 = vmax.f32 %v536, 0.0
  %v542 = vld [vmem:[%s0] sm:$0xff]
  %v543 = vld [vmem:[%s3] sm:$0xff]
  %v544 = vld [vmem:[%s3 + $0x8] sm:$0xff]
  %v545 = vld [vmem:[%s3 + $0x10] sm:$0xff]
  %v546 = vld [vmem:[%s3 + $0x18] sm:$0xff]
  %v547 = vld [vmem:[%s3 + $0x20] sm:$0xff]
  %v548 = vld [vmem:[%s3 + $0x28] sm:$0xff]
  %v549 = vld [vmem:[%s3 + $0x30] sm:$0xff]
  %v550 = vld [vmem:[%s3 + $0x38] sm:$0xff]
  %v551 = vld [vmem:[%s3 + $0x40] sm:$0xff]
  %v552 = vld [vmem:[%s3 + $0x48] sm:$0xff]
  %v553 = vld [vmem:[%s3 + $0x50] sm:$0xff]
  %v554 = vld [vmem:[%s3 + $0x58] sm:$0xff]
  %v555 = vld [vmem:[%s3 + $0x60] sm:$0xff]
  %v556 = vld [vmem:[%s3 + $0x68] sm:$0xff]
  %v557 = vld [vmem:[%s3 + $0x70] sm:$0xff]
  %v558 = vld [vmem:[%s3 + $0x78] sm:$0xff]
  %v559 = vpack.c.bf16 %v542, %v542
  %v560 = vld [vmem:[%s3 + $0x80] sm:$0xff]
  %v561 = vld [vmem:[%s3 + $0x88] sm:$0xff]
  %v562 = vld [vmem:[%s3 + $0x90] sm:$0xff]
  %v563 = vld [vmem:[%s3 + $0x98] sm:$0xff]
  %v564 = vld [vmem:[%s3 + $0xa0] sm:$0xff]
  %v565 = vld [vmem:[%s3 + $0xa8] sm:$0xff]
  %v566 = vld [vmem:[%s3 + $0xb0] sm:$0xff]
  %v567 = vld [vmem:[%s3 + $0xb8] sm:$0xff]
  %v568 = vld [vmem:[%s3 + $0xc0] sm:$0xff]
  %v569 = vld [vmem:[%s3 + $0xc8] sm:$0xff]
  %v570 = vld [vmem:[%s3 + $0xd0] sm:$0xff]
  %v571 = vld [vmem:[%s3 + $0xd8] sm:$0xff]
  %v572 = vld [vmem:[%s3 + $0xe0] sm:$0xff]
  %v573 = vld [vmem:[%s3 + $0xe8] sm:$0xff]
  %v574 = vld [vmem:[%s3 + $0xf0] sm:$0xff]
  %v575 = vld [vmem:[%s3 + $0xf8] sm:$0xff]
  %v576 = vpack.c.bf16 %v541, %v541
  %v593 = vunpack.c.l.b16 %v560
  %v594 = vunpack.c.h.b16 %v560
  %v595 = vunpack.c.l.b16 %v561
  %v596 = vunpack.c.h.b16 %v561
  %v597 = vunpack.c.l.b16 %v562
  %v598 = vunpack.c.h.b16 %v562
  %v599 = vunpack.c.l.b16 %v563
  %v600 = vunpack.c.h.b16 %v563
  %v601 = vunpack.c.l.b16 %v564
  %v602 = vunpack.c.h.b16 %v564
  %v603 = vunpack.c.l.b16 %v565
  %v604 = vunpack.c.h.b16 %v565
  %v605 = vunpack.c.l.b16 %v566
  %v606 = vunpack.c.h.b16 %v566
  %v607 = vunpack.c.l.b16 %v567
  %v608 = vunpack.c.h.b16 %v567
  %v609 = vunpack.c.l.b16 %v568
  %v610 = vunpack.c.h.b16 %v568
  %v611 = vunpack.c.l.b16 %v569
  %v612 = vunpack.c.h.b16 %v569
  %v613 = vunpack.c.l.b16 %v570
  %v614 = vunpack.c.h.b16 %v570
  %v615 = vunpack.c.l.b16 %v571
  %v616 = vunpack.c.h.b16 %v571
  %v617 = vunpack.c.l.b16 %v572
  %v618 = vunpack.c.h.b16 %v572
  %v619 = vunpack.c.l.b16 %v573
  %v620 = vunpack.c.h.b16 %v573
  %v621 = vunpack.c.l.b16 %v574
  %v622 = vunpack.c.h.b16 %v574
  %v623 = vunpack.c.l.b16 %v575
  %v624 = vunpack.c.h.b16 %v575
  %v625 = vpack.c.b16 %v595, %v593
  %v626 = vpack.c.b16 %v596, %v594
  %v627 = vpack.c.b16 %v599, %v597
  %v628 = vpack.c.b16 %v600, %v598
  %v629 = vpack.c.b16 %v603, %v601
  %v630 = vpack.c.b16 %v604, %v602
  %v631 = vpack.c.b16 %v607, %v605
  %v632 = vpack.c.b16 %v608, %v606
  %v633 = vpack.c.b16 %v611, %v609
  %v634 = vpack.c.b16 %v612, %v610
  %v635 = vpack.c.b16 %v615, %v613
  %v636 = vpack.c.b16 %v616, %v614
  %v637 = vpack.c.b16 %v619, %v617
  %v638 = vpack.c.b16 %v620, %v618
  %v639 = vpack.c.b16 %v623, %v621
  %v640 = vpack.c.b16 %v624, %v622
  %657 = vmatprep.subr.bf16.mxu0 %v626
  %658 = vmatpush1.bf16.msra.mxu0 %v625
  %659 = vmatprep.subr.bf16.mxu0 %v628
  %660 = vmatpush1.bf16.msra.mxu0 %v627
  %661 = vmatprep.subr.bf16.mxu0 %v630
  %662 = vmatpush1.bf16.msra.mxu0 %v629
  %663 = vmatprep.subr.bf16.mxu0 %v632
  %664 = vmatpush1.bf16.msra.mxu0 %v631
  %665 = vmatprep.subr.bf16.mxu0 %v634
  %666 = vmatpush1.bf16.msra.mxu0 %v633
  %667 = vmatprep.subr.bf16.mxu0 %v636
  %668 = vmatpush1.bf16.msra.mxu0 %v635
  %669 = vmatprep.subr.bf16.mxu0 %v638
  %670 = vmatpush1.bf16.msra.mxu0 %v637
  %671 = vmatprep.subr.bf16.mxu0 %v640
  %672 = vmatpush1.bf16.msra.mxu0 %v639
  %673 = vmatprep.subr.bf16.mxu0 0
  %674 = vmatpush1.bf16.msra.mxu0 0
  %675 = vmatprep.subr.bf16.mxu0 0
  %676 = vmatpush1.bf16.msra.mxu0 0
  %677 = vmatprep.subr.bf16.mxu0 0
  %678 = vmatpush1.bf16.msra.mxu0 0
  %679 = vmatprep.subr.bf16.mxu0 0
  %680 = vmatpush1.bf16.msra.mxu0 0
  %681 = vmatprep.subr.bf16.mxu0 0
  %682 = vmatpush1.bf16.msra.mxu0 0
  %683 = vmatprep.subr.bf16.mxu0 0
  %684 = vmatpush1.bf16.msra.mxu0 0
  %685 = vmatprep.subr.bf16.mxu0 0
  %686 = vmatpush1.bf16.msra.mxu0 0
  %687 = vmatprep.subr.bf16.mxu0 0
  %688 = vmatpush1.bf16.msra.mxu0 0
  %689 = vmatprep.mubr.bf16.mxu0 0
  %690 = vmatmul.mubr.bf16.gmra.mrb[0].mxu0 %v576
  %v691 = vpop.f32.mrb[0].mxu0
  %v692 = vadd.f32 0.0, %v691
  %v693 = vpop.f32.mrb[0].mxu0
  %v694 = vadd.f32 0.0, %v693
  %v695 = vpop.f32.mrb[0].mxu0
  %v696 = vpop.f32.mrb[0].mxu0
  %697 = vdwg.mxu0
  %v714 = vunpack.c.l.b16 %v543
  %v715 = vunpack.c.h.b16 %v543
  %v716 = vunpack.c.l.b16 %v544
  %v717 = vunpack.c.h.b16 %v544
  %v718 = vunpack.c.l.b16 %v545
  %v719 = vunpack.c.h.b16 %v545
  %v720 = vunpack.c.l.b16 %v546
  %v721 = vunpack.c.h.b16 %v546
  %v722 = vunpack.c.l.b16 %v547
  %v723 = vunpack.c.h.b16 %v547
  %v724 = vunpack.c.l.b16 %v548
  %v725 = vunpack.c.h.b16 %v548
  %v726 = vunpack.c.l.b16 %v549
  %v727 = vunpack.c.h.b16 %v549
  %v728 = vunpack.c.l.b16 %v550
  %v729 = vunpack.c.h.b16 %v550
  %v730 = vunpack.c.l.b16 %v551
  %v731 = vunpack.c.h.b16 %v551
  %v732 = vunpack.c.l.b16 %v552
  %v733 = vunpack.c.h.b16 %v552
  %v734 = vunpack.c.l.b16 %v553
  %v735 = vunpack.c.h.b16 %v553
  %v736 = vunpack.c.l.b16 %v554
  %v737 = vunpack.c.h.b16 %v554
  %v738 = vunpack.c.l.b16 %v555
  %v739 = vunpack.c.h.b16 %v555
  %v740 = vunpack.c.l.b16 %v556
  %v741 = vunpack.c.h.b16 %v556
  %v742 = vunpack.c.l.b16 %v557
  %v743 = vunpack.c.h.b16 %v557
  %v744 = vunpack.c.l.b16 %v558
  %v745 = vunpack.c.h.b16 %v558
  %v746 = vpack.c.b16 %v716, %v714
  %v747 = vpack.c.b16 %v717, %v715
  %v748 = vpack.c.b16 %v720, %v718
  %v749 = vpack.c.b16 %v721, %v719
  %v750 = vpack.c.b16 %v724, %v722
  %v751 = vpack.c.b16 %v725, %v723
  %v752 = vpack.c.b16 %v728, %v726
  %v753 = vpack.c.b16 %v729, %v727
  %v754 = vpack.c.b16 %v732, %v730
  %v755 = vpack.c.b16 %v733, %v731
  %v756 = vpack.c.b16 %v736, %v734
  %v757 = vpack.c.b16 %v737, %v735
  %v758 = vpack.c.b16 %v740, %v738
  %v759 = vpack.c.b16 %v741, %v739
  %v760 = vpack.c.b16 %v744, %v742
  %v761 = vpack.c.b16 %v745, %v743
  %778 = vmatprep.subr.bf16.mxu0 %v747
  %779 = vmatpush1.bf16.msra.mxu0 %v746
  %780 = vmatprep.subr.bf16.mxu0 %v749
  %781 = vmatpush1.bf16.msra.mxu0 %v748
  %782 = vmatprep.subr.bf16.mxu0 %v751
  %783 = vmatpush1.bf16.msra.mxu0 %v750
  %784 = vmatprep.subr.bf16.mxu0 %v753
  %785 = vmatpush1.bf16.msra.mxu0 %v752
  %786 = vmatprep.subr.bf16.mxu0 %v755
  %787 = vmatpush1.bf16.msra.mxu0 %v754
  %788 = vmatprep.subr.bf16.mxu0 %v757
  %789 = vmatpush1.bf16.msra.mxu0 %v756
  %790 = vmatprep.subr.bf16.mxu0 %v759
  %791 = vmatpush1.bf16.msra.mxu0 %v758
  %792 = vmatprep.subr.bf16.mxu0 %v761
  %793 = vmatpush1.bf16.msra.mxu0 %v760
  %794 = vmatprep.subr.bf16.mxu0 0
  %795 = vmatpush1.bf16.msra.mxu0 0
  %796 = vmatprep.subr.bf16.mxu0 0
  %797 = vmatpush1.bf16.msra.mxu0 0
  %798 = vmatprep.subr.bf16.mxu0 0
  %799 = vmatpush1.bf16.msra.mxu0 0
  %800 = vmatprep.subr.bf16.mxu0 0
  %801 = vmatpush1.bf16.msra.mxu0 0
  %802 = vmatprep.subr.bf16.mxu0 0
  %803 = vmatpush1.bf16.msra.mxu0 0
  %804 = vmatprep.subr.bf16.mxu0 0
  %805 = vmatpush1.bf16.msra.mxu0 0
  %806 = vmatprep.subr.bf16.mxu0 0
  %807 = vmatpush1.bf16.msra.mxu0 0
  %808 = vmatprep.subr.bf16.mxu0 0
  %809 = vmatpush1.bf16.msra.mxu0 0
  %810 = vmatprep.mubr.bf16.mxu0 0
  %811 = vmatmul.mubr.bf16.gmra.mrb[0].mxu0 %v559
  %v812 = vpop.f32.mrb[0].mxu0
  %v813 = vadd.f32 %v692, %v812
  %v814 = vpop.f32.mrb[0].mxu0
  %v815 = vadd.f32 %v694, %v814
  %v816 = vpop.f32.mrb[0].mxu0
  %v817 = vpop.f32.mrb[0].mxu0
  %818 = vdwg.mxu0
  %s819 = scalar_lea.vmem %s5, 1
  %v820 = vld [vmem:[%s819] ss:$8 sm:$0x3]
  %v822 = vlaneseq
  %v823 = vshrl.u32 %v822, 7
  %v824 = vsub.s32 0, %v823
  %v825 = vrot.slane %v820, %v824
  %v826 = vlaneseq
  %v827 = vshrl.u32 %v826, 7
  %v828 = vsub.s32 1, %v827
  %v829 = vrot.slane %v820, %v828
  %v832 = vadd.f32 %v813, %v825
  %v833 = vadd.f32 %v815, %v829
  %v834 = vmax.f32 %v832, 0.0
  %v835 = vmax.f32 %v833, 0.0
  %v836 = vld [vmem:[%s4] sm:$0xff]
  %v837 = vld [vmem:[%s4 + $0x8] sm:$0xff]
  %v838 = vld [vmem:[%s4 + $0x10] sm:$0xff]
  %v839 = vld [vmem:[%s4 + $0x18] sm:$0xff]
  %v840 = vld [vmem:[%s4 + $0x20] sm:$0xff]
  %v841 = vld [vmem:[%s4 + $0x28] sm:$0xff]
  %v842 = vld [vmem:[%s4 + $0x30] sm:$0xff]
  %v843 = vld [vmem:[%s4 + $0x38] sm:$0xff]
  %v844 = vld [vmem:[%s4 + $0x40] sm:$0xff]
  %v845 = vld [vmem:[%s4 + $0x48] sm:$0xff]
  %v846 = vld [vmem:[%s4 + $0x50] sm:$0xff]
  %v847 = vld [vmem:[%s4 + $0x58] sm:$0xff]
  %v848 = vld [vmem:[%s4 + $0x60] sm:$0xff]
  %v849 = vld [vmem:[%s4 + $0x68] sm:$0xff]
  %v850 = vld [vmem:[%s4 + $0x70] sm:$0xff]
  %v851 = vld [vmem:[%s4 + $0x78] sm:$0xff]
  %v852 = vld [vmem:[%s4 + $0x80] sm:$0xff]
  %v853 = vld [vmem:[%s4 + $0x88] sm:$0xff]
  %v854 = vld [vmem:[%s4 + $0x90] sm:$0xff]
  %v855 = vld [vmem:[%s4 + $0x98] sm:$0xff]
  %v856 = vld [vmem:[%s4 + $0xa0] sm:$0xff]
  %v857 = vld [vmem:[%s4 + $0xa8] sm:$0xff]
  %v858 = vld [vmem:[%s4 + $0xb0] sm:$0xff]
  %v859 = vld [vmem:[%s4 + $0xb8] sm:$0xff]
  %v860 = vld [vmem:[%s4 + $0xc0] sm:$0xff]
  %v861 = vld [vmem:[%s4 + $0xc8] sm:$0xff]
  %v862 = vld [vmem:[%s4 + $0xd0] sm:$0xff]
  %v863 = vld [vmem:[%s4 + $0xd8] sm:$0xff]
  %v864 = vld [vmem:[%s4 + $0xe0] sm:$0xff]
  %v865 = vld [vmem:[%s4 + $0xe8] sm:$0xff]
  %v866 = vld [vmem:[%s4 + $0xf0] sm:$0xff]
  %v867 = vld [vmem:[%s4 + $0xf8] sm:$0xff]
  %v868 = vld [vmem:[%s4 + $0x100] sm:$0xff]
  %v869 = vld [vmem:[%s4 + $0x108] sm:$0xff]
  %v870 = vld [vmem:[%s4 + $0x110] sm:$0xff]
  %v871 = vld [vmem:[%s4 + $0x118] sm:$0xff]
  %v872 = vld [vmem:[%s4 + $0x120] sm:$0xff]
  %v873 = vld [vmem:[%s4 + $0x128] sm:$0xff]
  %v874 = vld [vmem:[%s4 + $0x130] sm:$0xff]
  %v875 = vld [vmem:[%s4 + $0x138] sm:$0xff]
  %v876 = vld [vmem:[%s4 + $0x140] sm:$0xff]
  %v877 = vld [vmem:[%s4 + $0x148] sm:$0xff]
  %v878 = vld [vmem:[%s4 + $0x150] sm:$0xff]
  %v879 = vld [vmem:[%s4 + $0x158] sm:$0xff]
  %v880 = vld [vmem:[%s4 + $0x160] sm:$0xff]
  %v881 = vld [vmem:[%s4 + $0x168] sm:$0xff]
  %v882 = vld [vmem:[%s4 + $0x170] sm:$0xff]
  %v883 = vld [vmem:[%s4 + $0x178] sm:$0xff]
  %v884 = vld [vmem:[%s4 + $0x180] sm:$0xff]
  %v885 = vld [vmem:[%s4 + $0x188] sm:$0xff]
  %v886 = vld [vmem:[%s4 + $0x190] sm:$0xff]
  %v887 = vld [vmem:[%s4 + $0x198] sm:$0xff]
  %v888 = vld [vmem:[%s4 + $0x1a0] sm:$0xff]
  %v889 = vld [vmem:[%s4 + $0x1a8] sm:$0xff]
  %v890 = vld [vmem:[%s4 + $0x1b0] sm:$0xff]
  %v891 = vld [vmem:[%s4 + $0x1b8] sm:$0xff]
  %v892 = vld [vmem:[%s4 + $0x1c0] sm:$0xff]
  %v893 = vld [vmem:[%s4 + $0x1c8] sm:$0xff]
  %v894 = vld [vmem:[%s4 + $0x1d0] sm:$0xff]
  %v895 = vld [vmem:[%s4 + $0x1d8] sm:$0xff]
  %v896 = vld [vmem:[%s4 + $0x1e0] sm:$0xff]
  %v897 = vld [vmem:[%s4 + $0x1e8] sm:$0xff]
  %v898 = vld [vmem:[%s4 + $0x1f0] sm:$0xff]
  %v899 = vld [vmem:[%s4 + $0x1f8] sm:$0xff]
  %v900 = vpack.c.bf16 %v834, %v834
  %v901 = vpack.c.bf16 %v835, %v835
  %s902 = scalar_lea.vmem %s5, 2
  %v903 = vld [vmem:[%s902] ss:$8 sm:$0xf]
  %v905 = vlaneseq
  %v906 = vshrl.u32 %v905, 7
  %v907 = vsub.s32 0, %v906
  %v908 = vrot.slane %v903, %v907
  %v909 = vlaneseq
  %v910 = vshrl.u32 %v909, 7
  %v911 = vsub.s32 1, %v910
  %v912 = vrot.slane %v903, %v911
  %v913 = vlaneseq
  %v914 = vshrl.u32 %v913, 7
  %v915 = vsub.s32 2, %v914
  %v916 = vrot.slane %v903, %v915
  %v917 = vlaneseq
  %v918 = vshrl.u32 %v917, 7
  %v919 = vsub.s32 3, %v918
  %v920 = vrot.slane %v903, %v919
  %v989 = vunpack.c.l.b16 %v836
  %v990 = vunpack.c.h.b16 %v836
  %v991 = vunpack.c.l.b16 %v837
  %v992 = vunpack.c.h.b16 %v837
  %v993 = vunpack.c.l.b16 %v838
  %v994 = vunpack.c.h.b16 %v838
  %v995 = vunpack.c.l.b16 %v839
  %v996 = vunpack.c.h.b16 %v839
  %v997 = vunpack.c.l.b16 %v840
  %v998 = vunpack.c.h.b16 %v840
  %v999 = vunpack.c.l.b16 %v841
  %v1000 = vunpack.c.h.b16 %v841
  %v1001 = vunpack.c.l.b16 %v842
  %v1002 = vunpack.c.h.b16 %v842
  %v1003 = vunpack.c.l.b16 %v843
  %v1004 = vunpack.c.h.b16 %v843
  %v1005 = vunpack.c.l.b16 %v844
  %v1006 = vunpack.c.h.b16 %v844
  %v1007 = vunpack.c.l.b16 %v845
  %v1008 = vunpack.c.h.b16 %v845
  %v1009 = vunpack.c.l.b16 %v846
  %v1010 = vunpack.c.h.b16 %v846
  %v1011 = vunpack.c.l.b16 %v847
  %v1012 = vunpack.c.h.b16 %v847
  %v1013 = vunpack.c.l.b16 %v848
  %v1014 = vunpack.c.h.b16 %v848
  %v1015 = vunpack.c.l.b16 %v849
  %v1016 = vunpack.c.h.b16 %v849
  %v1017 = vunpack.c.l.b16 %v850
  %v1018 = vunpack.c.h.b16 %v850
  %v1019 = vunpack.c.l.b16 %v851
  %v1020 = vunpack.c.h.b16 %v851
  %v1021 = vunpack.c.l.b16 %v852
  %v1022 = vunpack.c.h.b16 %v852
  %v1023 = vunpack.c.l.b16 %v853
  %v1024 = vunpack.c.h.b16 %v853
  %v1025 = vunpack.c.l.b16 %v854
  %v1026 = vunpack.c.h.b16 %v854
  %v1027 = vunpack.c.l.b16 %v855
  %v1028 = vunpack.c.h.b16 %v855
  %v1029 = vunpack.c.l.b16 %v856
  %v1030 = vunpack.c.h.b16 %v856
  %v1031 = vunpack.c.l.b16 %v857
  %v1032 = vunpack.c.h.b16 %v857
  %v1033 = vunpack.c.l.b16 %v858
  %v1034 = vunpack.c.h.b16 %v858
  %v1035 = vunpack.c.l.b16 %v859
  %v1036 = vunpack.c.h.b16 %v859
  %v1037 = vunpack.c.l.b16 %v860
  %v1038 = vunpack.c.h.b16 %v860
  %v1039 = vunpack.c.l.b16 %v861
  %v1040 = vunpack.c.h.b16 %v861
  %v1041 = vunpack.c.l.b16 %v862
  %v1042 = vunpack.c.h.b16 %v862
  %v1043 = vunpack.c.l.b16 %v863
  %v1044 = vunpack.c.h.b16 %v863
  %v1045 = vunpack.c.l.b16 %v864
  %v1046 = vunpack.c.h.b16 %v864
  %v1047 = vunpack.c.l.b16 %v865
  %v1048 = vunpack.c.h.b16 %v865
  %v1049 = vunpack.c.l.b16 %v866
  %v1050 = vunpack.c.h.b16 %v866
  %v1051 = vunpack.c.l.b16 %v867
  %v1052 = vunpack.c.h.b16 %v867
  %v1053 = vunpack.c.l.b16 %v868
  %v1054 = vunpack.c.h.b16 %v868
  %v1055 = vunpack.c.l.b16 %v869
  %v1056 = vunpack.c.h.b16 %v869
  %v1057 = vunpack.c.l.b16 %v870
  %v1058 = vunpack.c.h.b16 %v870
  %v1059 = vunpack.c.l.b16 %v871
  %v1060 = vunpack.c.h.b16 %v871
  %v1061 = vunpack.c.l.b16 %v872
  %v1062 = vunpack.c.h.b16 %v872
  %v1063 = vunpack.c.l.b16 %v873
  %v1064 = vunpack.c.h.b16 %v873
  %v1065 = vunpack.c.l.b16 %v874
  %v1066 = vunpack.c.h.b16 %v874
  %v1067 = vunpack.c.l.b16 %v875
  %v1068 = vunpack.c.h.b16 %v875
  %v1069 = vunpack.c.l.b16 %v876
  %v1070 = vunpack.c.h.b16 %v876
  %v1071 = vunpack.c.l.b16 %v877
  %v1072 = vunpack.c.h.b16 %v877
  %v1073 = vunpack.c.l.b16 %v878
  %v1074 = vunpack.c.h.b16 %v878
  %v1075 = vunpack.c.l.b16 %v879
  %v1076 = vunpack.c.h.b16 %v879
  %v1077 = vunpack.c.l.b16 %v880
  %v1078 = vunpack.c.h.b16 %v880
  %v1079 = vunpack.c.l.b16 %v881
  %v1080 = vunpack.c.h.b16 %v881
  %v1081 = vunpack.c.l.b16 %v882
  %v1082 = vunpack.c.h.b16 %v882
  %v1083 = vunpack.c.l.b16 %v883
  %v1084 = vunpack.c.h.b16 %v883
  %v1085 = vunpack.c.l.b16 %v884
  %v1086 = vunpack.c.h.b16 %v884
  %v1087 = vunpack.c.l.b16 %v885
  %v1088 = vunpack.c.h.b16 %v885
  %v1089 = vunpack.c.l.b16 %v886
  %v1090 = vunpack.c.h.b16 %v886
  %v1091 = vunpack.c.l.b16 %v887
  %v1092 = vunpack.c.h.b16 %v887
  %v1093 = vunpack.c.l.b16 %v888
  %v1094 = vunpack.c.h.b16 %v888
  %v1095 = vunpack.c.l.b16 %v889
  %v1096 = vunpack.c.h.b16 %v889
  %v1097 = vunpack.c.l.b16 %v890
  %v1098 = vunpack.c.h.b16 %v890
  %v1099 = vunpack.c.l.b16 %v891
  %v1100 = vunpack.c.h.b16 %v891
  %v1101 = vunpack.c.l.b16 %v892
  %v1102 = vunpack.c.h.b16 %v892
  %v1103 = vunpack.c.l.b16 %v893
  %v1104 = vunpack.c.h.b16 %v893
  %v1105 = vunpack.c.l.b16 %v894
  %v1106 = vunpack.c.h.b16 %v894
  %v1107 = vunpack.c.l.b16 %v895
  %v1108 = vunpack.c.h.b16 %v895
  %v1109 = vunpack.c.l.b16 %v896
  %v1110 = vunpack.c.h.b16 %v896
  %v1111 = vunpack.c.l.b16 %v897
  %v1112 = vunpack.c.h.b16 %v897
  %v1113 = vunpack.c.l.b16 %v898
  %v1114 = vunpack.c.h.b16 %v898
  %v1115 = vunpack.c.l.b16 %v899
  %v1116 = vunpack.c.h.b16 %v899
  %v1117 = vpack.c.b16 %v993, %v989
  %v1118 = vpack.c.b16 %v994, %v990
  %v1119 = vpack.c.b16 %v995, %v991
  %v1120 = vpack.c.b16 %v996, %v992
  %v1121 = vpack.c.b16 %v1001, %v997
  %v1122 = vpack.c.b16 %v1002, %v998
  %v1123 = vpack.c.b16 %v1003, %v999
  %v1124 = vpack.c.b16 %v1004, %v1000
  %v1125 = vpack.c.b16 %v1009, %v1005
  %v1126 = vpack.c.b16 %v1010, %v1006
  %v1127 = vpack.c.b16 %v1011, %v1007
  %v1128 = vpack.c.b16 %v1012, %v1008
  %v1129 = vpack.c.b16 %v1017, %v1013
  %v1130 = vpack.c.b16 %v1018, %v1014
  %v1131 = vpack.c.b16 %v1019, %v1015
  %v1132 = vpack.c.b16 %v1020, %v1016
  %v1133 = vpack.c.b16 %v1025, %v1021
  %v1134 = vpack.c.b16 %v1026, %v1022
  %v1135 = vpack.c.b16 %v1027, %v1023
  %v1136 = vpack.c.b16 %v1028, %v1024
  %v1137 = vpack.c.b16 %v1033, %v1029
  %v1138 = vpack.c.b16 %v1034, %v1030
  %v1139 = vpack.c.b16 %v1035, %v1031
  %v1140 = vpack.c.b16 %v1036, %v1032
  %v1141 = vpack.c.b16 %v1041, %v1037
  %v1142 = vpack.c.b16 %v1042, %v1038
  %v1143 = vpack.c.b16 %v1043, %v1039
  %v1144 = vpack.c.b16 %v1044, %v1040
  %v1145 = vpack.c.b16 %v1049, %v1045
  %v1146 = vpack.c.b16 %v1050, %v1046
  %v1147 = vpack.c.b16 %v1051, %v1047
  %v1148 = vpack.c.b16 %v1052, %v1048
  %v1149 = vpack.c.b16 %v1057, %v1053
  %v1150 = vpack.c.b16 %v1058, %v1054
  %v1151 = vpack.c.b16 %v1059, %v1055
  %v1152 = vpack.c.b16 %v1060, %v1056
  %v1153 = vpack.c.b16 %v1065, %v1061
  %v1154 = vpack.c.b16 %v1066, %v1062
  %v1155 = vpack.c.b16 %v1067, %v1063
  %v1156 = vpack.c.b16 %v1068, %v1064
  %v1157 = vpack.c.b16 %v1073, %v1069
  %v1158 = vpack.c.b16 %v1074, %v1070
  %v1159 = vpack.c.b16 %v1075, %v1071
  %v1160 = vpack.c.b16 %v1076, %v1072
  %v1161 = vpack.c.b16 %v1081, %v1077
  %v1162 = vpack.c.b16 %v1082, %v1078
  %v1163 = vpack.c.b16 %v1083, %v1079
  %v1164 = vpack.c.b16 %v1084, %v1080
  %v1165 = vpack.c.b16 %v1089, %v1085
  %v1166 = vpack.c.b16 %v1090, %v1086
  %v1167 = vpack.c.b16 %v1091, %v1087
  %v1168 = vpack.c.b16 %v1092, %v1088
  %v1169 = vpack.c.b16 %v1097, %v1093
  %v1170 = vpack.c.b16 %v1098, %v1094
  %v1171 = vpack.c.b16 %v1099, %v1095
  %v1172 = vpack.c.b16 %v1100, %v1096
  %v1173 = vpack.c.b16 %v1105, %v1101
  %v1174 = vpack.c.b16 %v1106, %v1102
  %v1175 = vpack.c.b16 %v1107, %v1103
  %v1176 = vpack.c.b16 %v1108, %v1104
  %v1177 = vpack.c.b16 %v1113, %v1109
  %v1178 = vpack.c.b16 %v1114, %v1110
  %v1179 = vpack.c.b16 %v1115, %v1111
  %v1180 = vpack.c.b16 %v1116, %v1112
  %1245 = vmatprep.subr.bf16.mxu0 %v1118
  %1246 = vmatpush1.bf16.msra.mxu0 %v1117
  %1247 = vmatprep.subr.bf16.mxu0 %v1122
  %1248 = vmatpush1.bf16.msra.mxu0 %v1121
  %1249 = vmatprep.subr.bf16.mxu0 %v1126
  %1250 = vmatpush1.bf16.msra.mxu0 %v1125
  %1251 = vmatprep.subr.bf16.mxu0 %v1130
  %1252 = vmatpush1.bf16.msra.mxu0 %v1129
  %1253 = vmatprep.subr.bf16.mxu0 %v1134
  %1254 = vmatpush1.bf16.msra.mxu0 %v1133
  %1255 = vmatprep.subr.bf16.mxu0 %v1138
  %1256 = vmatpush1.bf16.msra.mxu0 %v1137
  %1257 = vmatprep.subr.bf16.mxu0 %v1142
  %1258 = vmatpush1.bf16.msra.mxu0 %v1141
  %1259 = vmatprep.subr.bf16.mxu0 %v1146
  %1260 = vmatpush1.bf16.msra.mxu0 %v1145
  %1261 = vmatprep.subr.bf16.mxu0 %v1150
  %1262 = vmatpush1.bf16.msra.mxu0 %v1149
  %1263 = vmatprep.subr.bf16.mxu0 %v1154
  %1264 = vmatpush1.bf16.msra.mxu0 %v1153
  %1265 = vmatprep.subr.bf16.mxu0 %v1158
  %1266 = vmatpush1.bf16.msra.mxu0 %v1157
  %1267 = vmatprep.subr.bf16.mxu0 %v1162
  %1268 = vmatpush1.bf16.msra.mxu0 %v1161
  %1269 = vmatprep.subr.bf16.mxu0 %v1166
  %1270 = vmatpush1.bf16.msra.mxu0 %v1165
  %1271 = vmatprep.subr.bf16.mxu0 %v1170
  %1272 = vmatpush1.bf16.msra.mxu0 %v1169
  %1273 = vmatprep.subr.bf16.mxu0 %v1174
  %1274 = vmatpush1.bf16.msra.mxu0 %v1173
  %1275 = vmatprep.subr.bf16.mxu0 %v1178
  %1276 = vmatpush1.bf16.msra.mxu0 %v1177
  %1277 = vmatprep.mubr.bf16.mxu0 %v901
  %1278 = vmatmul.mubr.bf16.gmra.mrb[0].mxu0 %v900
  %v1279 = vpop.f32.mrb[0].mxu0
  %v1280 = vadd.f32 %v908, %v1279
  %v1281 = vpop.f32.mrb[0].mxu0
  %v1282 = vadd.f32 %v912, %v1281
  %v1283 = vpop.f32.mrb[0].mxu0
  %v1284 = vpop.f32.mrb[0].mxu0
  %1285 = vdwg.mxu0
  %1286 = vmatprep.subr.bf16.mxu0 %v1120
  %1287 = vmatpush1.bf16.msra.mxu0 %v1119
  %1288 = vmatprep.subr.bf16.mxu0 %v1124
  %1289 = vmatpush1.bf16.msra.mxu0 %v1123
  %1290 = vmatprep.subr.bf16.mxu0 %v1128
  %1291 = vmatpush1.bf16.msra.mxu0 %v1127
  %1292 = vmatprep.subr.bf16.mxu0 %v1132
  %1293 = vmatpush1.bf16.msra.mxu0 %v1131
  %1294 = vmatprep.subr.bf16.mxu0 %v1136
  %1295 = vmatpush1.bf16.msra.mxu0 %v1135
  %1296 = vmatprep.subr.bf16.mxu0 %v1140
  %1297 = vmatpush1.bf16.msra.mxu0 %v1139
  %1298 = vmatprep.subr.bf16.mxu0 %v1144
  %1299 = vmatpush1.bf16.msra.mxu0 %v1143
  %1300 = vmatprep.subr.bf16.mxu0 %v1148
  %1301 = vmatpush1.bf16.msra.mxu0 %v1147
  %1302 = vmatprep.subr.bf16.mxu0 %v1152
  %1303 = vmatpush1.bf16.msra.mxu0 %v1151
  %1304 = vmatprep.subr.bf16.mxu0 %v1156
  %1305 = vmatpush1.bf16.msra.mxu0 %v1155
  %1306 = vmatprep.subr.bf16.mxu0 %v1160
  %1307 = vmatpush1.bf16.msra.mxu0 %v1159
  %1308 = vmatprep.subr.bf16.mxu0 %v1164
  %1309 = vmatpush1.bf16.msra.mxu0 %v1163
  %1310 = vmatprep.subr.bf16.mxu0 %v1168
  %1311 = vmatpush1.bf16.msra.mxu0 %v1167
  %1312 = vmatprep.subr.bf16.mxu0 %v1172
  %1313 = vmatpush1.bf16.msra.mxu0 %v1171
  %1314 = vmatprep.subr.bf16.mxu0 %v1176
  %1315 = vmatpush1.bf16.msra.mxu0 %v1175
  %1316 = vmatprep.subr.bf16.mxu0 %v1180
  %1317 = vmatpush1.bf16.msra.mxu0 %v1179
  %1318 = vmatprep.mubr.bf16.mxu0 %v901
  %1319 = vmatmul.mubr.bf16.gmra.mrb[0].mxu0 %v900
  %v1320 = vpop.f32.mrb[0].mxu0
  %v1321 = vadd.f32 %v916, %v1320
  %v1322 = vpop.f32.mrb[0].mxu0
  %v1323 = vadd.f32 %v920, %v1322
  %v1324 = vpop.f32.mrb[0].mxu0
  %v1325 = vpop.f32.mrb[0].mxu0
  %1326 = vdwg.mxu0
  %v1327 = vmax.f32 %v1280, 0.0
  %v1328 = vmax.f32 %v1282, 0.0
  %v1329 = vmax.f32 %v1321, 0.0
  %v1330 = vmax.f32 %v1323, 0.0
  %v1331 = vld [vmem:[%s3 + $0x100] sm:$0xff]
  %v1332 = vld [vmem:[%s3 + $0x108] sm:$0xff]
  %v1333 = vld [vmem:[%s3 + $0x110] sm:$0xff]
  %v1334 = vld [vmem:[%s3 + $0x118] sm:$0xff]
  %v1335 = vld [vmem:[%s3 + $0x120] sm:$0xff]
  %v1336 = vld [vmem:[%s3 + $0x128] sm:$0xff]
  %v1337 = vld [vmem:[%s3 + $0x130] sm:$0xff]
  %v1338 = vld [vmem:[%s3 + $0x138] sm:$0xff]
  %v1339 = vld [vmem:[%s3 + $0x140] sm:$0xff]
  %v1340 = vld [vmem:[%s3 + $0x148] sm:$0xff]
  %v1341 = vld [vmem:[%s3 + $0x150] sm:$0xff]
  %v1342 = vld [vmem:[%s3 + $0x158] sm:$0xff]
  %v1343 = vld [vmem:[%s3 + $0x160] sm:$0xff]
  %v1344 = vld [vmem:[%s3 + $0x168] sm:$0xff]
  %v1345 = vld [vmem:[%s3 + $0x170] sm:$0xff]
  %v1346 = vld [vmem:[%s3 + $0x178] sm:$0xff]
  %v1347 = vld [vmem:[%s3 + $0x180] sm:$0xff]
  %v1348 = vld [vmem:[%s3 + $0x188] sm:$0xff]
  %v1349 = vld [vmem:[%s3 + $0x190] sm:$0xff]
  %v1350 = vld [vmem:[%s3 + $0x198] sm:$0xff]
  %v1351 = vld [vmem:[%s3 + $0x1a0] sm:$0xff]
  %v1352 = vld [vmem:[%s3 + $0x1a8] sm:$0xff]
  %v1353 = vld [vmem:[%s3 + $0x1b0] sm:$0xff]
  %v1354 = vld [vmem:[%s3 + $0x1b8] sm:$0xff]
  %v1355 = vld [vmem:[%s3 + $0x1c0] sm:$0xff]
  %v1356 = vld [vmem:[%s3 + $0x1c8] sm:$0xff]
  %v1357 = vld [vmem:[%s3 + $0x1d0] sm:$0xff]
  %v1358 = vld [vmem:[%s3 + $0x1d8] sm:$0xff]
  %v1359 = vld [vmem:[%s3 + $0x1e0] sm:$0xff]
  %v1360 = vld [vmem:[%s3 + $0x1e8] sm:$0xff]
  %v1361 = vld [vmem:[%s3 + $0x1f0] sm:$0xff]
  %v1362 = vld [vmem:[%s3 + $0x1f8] sm:$0xff]
  %v1363 = vld [vmem:[%s3 + $0x200] sm:$0xff]
  %v1364 = vld [vmem:[%s3 + $0x208] sm:$0xff]
  %v1365 = vld [vmem:[%s3 + $0x210] sm:$0xff]
  %v1366 = vld [vmem:[%s3 + $0x218] sm:$0xff]
  %v1367 = vld [vmem:[%s3 + $0x220] sm:$0xff]
  %v1368 = vld [vmem:[%s3 + $0x228] sm:$0xff]
  %v1369 = vld [vmem:[%s3 + $0x230] sm:$0xff]
  %v1370 = vld [vmem:[%s3 + $0x238] sm:$0xff]
  %v1371 = vld [vmem:[%s3 + $0x240] sm:$0xff]
  %v1372 = vld [vmem:[%s3 + $0x248] sm:$0xff]
  %v1373 = vld [vmem:[%s3 + $0x250] sm:$0xff]
  %v1374 = vld [vmem:[%s3 + $0x258] sm:$0xff]
  %v1375 = vld [vmem:[%s3 + $0x260] sm:$0xff]
  %v1376 = vld [vmem:[%s3 + $0x268] sm:$0xff]
  %v1377 = vld [vmem:[%s3 + $0x270] sm:$0xff]
  %v1378 = vld [vmem:[%s3 + $0x278] sm:$0xff]
  %v1379 = vld [vmem:[%s3 + $0x280] sm:$0xff]
  %v1380 = vld [vmem:[%s3 + $0x288] sm:$0xff]
  %v1381 = vld [vmem:[%s3 + $0x290] sm:$0xff]
  %v1382 = vld [vmem:[%s3 + $0x298] sm:$0xff]
  %v1383 = vld [vmem:[%s3 + $0x2a0] sm:$0xff]
  %v1384 = vld [vmem:[%s3 + $0x2a8] sm:$0xff]
  %v1385 = vld [vmem:[%s3 + $0x2b0] sm:$0xff]
  %v1386 = vld [vmem:[%s3 + $0x2b8] sm:$0xff]
  %v1387 = vld [vmem:[%s3 + $0x2c0] sm:$0xff]
  %v1388 = vld [vmem:[%s3 + $0x2c8] sm:$0xff]
  %v1389 = vld [vmem:[%s3 + $0x2d0] sm:$0xff]
  %v1390 = vld [vmem:[%s3 + $0x2d8] sm:$0xff]
  %v1391 = vld [vmem:[%s3 + $0x2e0] sm:$0xff]
  %v1392 = vld [vmem:[%s3 + $0x2e8] sm:$0xff]
  %v1393 = vld [vmem:[%s3 + $0x2f0] sm:$0xff]
  %v1394 = vld [vmem:[%s3 + $0x2f8] sm:$0xff]
  %v1395 = vpack.c.bf16 %v1327, %v1327
  %v1396 = vpack.c.bf16 %v1328, %v1328
  %v1397 = vpack.c.bf16 %v1329, %v1329
  %v1398 = vpack.c.bf16 %v1330, %v1330
  %s1399 = scalar_lea.vmem %s5, 3
  %v1400 = vld [vmem:[%s1399] ss:$8 sm:$0x3]
  %v1402 = vlaneseq
  %v1403 = vshrl.u32 %v1402, 7
  %v1404 = vsub.s32 0, %v1403
  %v1405 = vrot.slane %v1400, %v1404
  %v1406 = vlaneseq
  %v1407 = vshrl.u32 %v1406, 7
  %v1408 = vsub.s32 1, %v1407
  %v1409 = vrot.slane %v1400, %v1408
  %v1476 = vunpack.c.l.b16 %v1331
  %v1477 = vunpack.c.h.b16 %v1331
  %v1478 = vunpack.c.l.b16 %v1332
  %v1479 = vunpack.c.h.b16 %v1332
  %v1480 = vunpack.c.l.b16 %v1333
  %v1481 = vunpack.c.h.b16 %v1333
  %v1482 = vunpack.c.l.b16 %v1334
  %v1483 = vunpack.c.h.b16 %v1334
  %v1484 = vunpack.c.l.b16 %v1335
  %v1485 = vunpack.c.h.b16 %v1335
  %v1486 = vunpack.c.l.b16 %v1336
  %v1487 = vunpack.c.h.b16 %v1336
  %v1488 = vunpack.c.l.b16 %v1337
  %v1489 = vunpack.c.h.b16 %v1337
  %v1490 = vunpack.c.l.b16 %v1338
  %v1491 = vunpack.c.h.b16 %v1338
  %v1492 = vunpack.c.l.b16 %v1339
  %v1493 = vunpack.c.h.b16 %v1339
  %v1494 = vunpack.c.l.b16 %v1340
  %v1495 = vunpack.c.h.b16 %v1340
  %v1496 = vunpack.c.l.b16 %v1341
  %v1497 = vunpack.c.h.b16 %v1341
  %v1498 = vunpack.c.l.b16 %v1342
  %v1499 = vunpack.c.h.b16 %v1342
  %v1500 = vunpack.c.l.b16 %v1343
  %v1501 = vunpack.c.h.b16 %v1343
  %v1502 = vunpack.c.l.b16 %v1344
  %v1503 = vunpack.c.h.b16 %v1344
  %v1504 = vunpack.c.l.b16 %v1345
  %v1505 = vunpack.c.h.b16 %v1345
  %v1506 = vunpack.c.l.b16 %v1346
  %v1507 = vunpack.c.h.b16 %v1346
  %v1508 = vunpack.c.l.b16 %v1347
  %v1509 = vunpack.c.h.b16 %v1347
  %v1510 = vunpack.c.l.b16 %v1348
  %v1511 = vunpack.c.h.b16 %v1348
  %v1512 = vunpack.c.l.b16 %v1349
  %v1513 = vunpack.c.h.b16 %v1349
  %v1514 = vunpack.c.l.b16 %v1350
  %v1515 = vunpack.c.h.b16 %v1350
  %v1516 = vunpack.c.l.b16 %v1351
  %v1517 = vunpack.c.h.b16 %v1351
  %v1518 = vunpack.c.l.b16 %v1352
  %v1519 = vunpack.c.h.b16 %v1352
  %v1520 = vunpack.c.l.b16 %v1353
  %v1521 = vunpack.c.h.b16 %v1353
  %v1522 = vunpack.c.l.b16 %v1354
  %v1523 = vunpack.c.h.b16 %v1354
  %v1524 = vunpack.c.l.b16 %v1355
  %v1525 = vunpack.c.h.b16 %v1355
  %v1526 = vunpack.c.l.b16 %v1356
  %v1527 = vunpack.c.h.b16 %v1356
  %v1528 = vunpack.c.l.b16 %v1357
  %v1529 = vunpack.c.h.b16 %v1357
  %v1530 = vunpack.c.l.b16 %v1358
  %v1531 = vunpack.c.h.b16 %v1358
  %v1532 = vunpack.c.l.b16 %v1359
  %v1533 = vunpack.c.h.b16 %v1359
  %v1534 = vunpack.c.l.b16 %v1360
  %v1535 = vunpack.c.h.b16 %v1360
  %v1536 = vunpack.c.l.b16 %v1361
  %v1537 = vunpack.c.h.b16 %v1361
  %v1538 = vunpack.c.l.b16 %v1362
  %v1539 = vunpack.c.h.b16 %v1362
  %v1540 = vunpack.c.l.b16 %v1363
  %v1541 = vunpack.c.h.b16 %v1363
  %v1542 = vunpack.c.l.b16 %v1364
  %v1543 = vunpack.c.h.b16 %v1364
  %v1544 = vunpack.c.l.b16 %v1365
  %v1545 = vunpack.c.h.b16 %v1365
  %v1546 = vunpack.c.l.b16 %v1366
  %v1547 = vunpack.c.h.b16 %v1366
  %v1548 = vunpack.c.l.b16 %v1367
  %v1549 = vunpack.c.h.b16 %v1367
  %v1550 = vunpack.c.l.b16 %v1368
  %v1551 = vunpack.c.h.b16 %v1368
  %v1552 = vunpack.c.l.b16 %v1369
  %v1553 = vunpack.c.h.b16 %v1369
  %v1554 = vunpack.c.l.b16 %v1370
  %v1555 = vunpack.c.h.b16 %v1370
  %v1556 = vunpack.c.l.b16 %v1371
  %v1557 = vunpack.c.h.b16 %v1371
  %v1558 = vunpack.c.l.b16 %v1372
  %v1559 = vunpack.c.h.b16 %v1372
  %v1560 = vunpack.c.l.b16 %v1373
  %v1561 = vunpack.c.h.b16 %v1373
  %v1562 = vunpack.c.l.b16 %v1374
  %v1563 = vunpack.c.h.b16 %v1374
  %v1564 = vunpack.c.l.b16 %v1375
  %v1565 = vunpack.c.h.b16 %v1375
  %v1566 = vunpack.c.l.b16 %v1376
  %v1567 = vunpack.c.h.b16 %v1376
  %v1568 = vunpack.c.l.b16 %v1377
  %v1569 = vunpack.c.h.b16 %v1377
  %v1570 = vunpack.c.l.b16 %v1378
  %v1571 = vunpack.c.h.b16 %v1378
  %v1572 = vunpack.c.l.b16 %v1379
  %v1573 = vunpack.c.h.b16 %v1379
  %v1574 = vunpack.c.l.b16 %v1380
  %v1575 = vunpack.c.h.b16 %v1380
  %v1576 = vunpack.c.l.b16 %v1381
  %v1577 = vunpack.c.h.b16 %v1381
  %v1578 = vunpack.c.l.b16 %v1382
  %v1579 = vunpack.c.h.b16 %v1382
  %v1580 = vunpack.c.l.b16 %v1383
  %v1581 = vunpack.c.h.b16 %v1383
  %v1582 = vunpack.c.l.b16 %v1384
  %v1583 = vunpack.c.h.b16 %v1384
  %v1584 = vunpack.c.l.b16 %v1385
  %v1585 = vunpack.c.h.b16 %v1385
  %v1586 = vunpack.c.l.b16 %v1386
  %v1587 = vunpack.c.h.b16 %v1386
  %v1588 = vunpack.c.l.b16 %v1387
  %v1589 = vunpack.c.h.b16 %v1387
  %v1590 = vunpack.c.l.b16 %v1388
  %v1591 = vunpack.c.h.b16 %v1388
  %v1592 = vunpack.c.l.b16 %v1389
  %v1593 = vunpack.c.h.b16 %v1389
  %v1594 = vunpack.c.l.b16 %v1390
  %v1595 = vunpack.c.h.b16 %v1390
  %v1596 = vunpack.c.l.b16 %v1391
  %v1597 = vunpack.c.h.b16 %v1391
  %v1598 = vunpack.c.l.b16 %v1392
  %v1599 = vunpack.c.h.b16 %v1392
  %v1600 = vunpack.c.l.b16 %v1393
  %v1601 = vunpack.c.h.b16 %v1393
  %v1602 = vunpack.c.l.b16 %v1394
  %v1603 = vunpack.c.h.b16 %v1394
  %v1604 = vpack.c.b16 %v1478, %v1476
  %v1605 = vpack.c.b16 %v1479, %v1477
  %v1606 = vpack.c.b16 %v1482, %v1480
  %v1607 = vpack.c.b16 %v1483, %v1481
  %v1608 = vpack.c.b16 %v1486, %v1484
  %v1609 = vpack.c.b16 %v1487, %v1485
  %v1610 = vpack.c.b16 %v1490, %v1488
  %v1611 = vpack.c.b16 %v1491, %v1489
  %v1612 = vpack.c.b16 %v1494, %v1492
  %v1613 = vpack.c.b16 %v1495, %v1493
  %v1614 = vpack.c.b16 %v1498, %v1496
  %v1615 = vpack.c.b16 %v1499, %v1497
  %v1616 = vpack.c.b16 %v1502, %v1500
  %v1617 = vpack.c.b16 %v1503, %v1501
  %v1618 = vpack.c.b16 %v1506, %v1504
  %v1619 = vpack.c.b16 %v1507, %v1505
  %v1620 = vpack.c.b16 %v1510, %v1508
  %v1621 = vpack.c.b16 %v1511, %v1509
  %v1622 = vpack.c.b16 %v1514, %v1512
  %v1623 = vpack.c.b16 %v1515, %v1513
  %v1624 = vpack.c.b16 %v1518, %v1516
  %v1625 = vpack.c.b16 %v1519, %v1517
  %v1626 = vpack.c.b16 %v1522, %v1520
  %v1627 = vpack.c.b16 %v1523, %v1521
  %v1628 = vpack.c.b16 %v1526, %v1524
  %v1629 = vpack.c.b16 %v1527, %v1525
  %v1630 = vpack.c.b16 %v1530, %v1528
  %v1631 = vpack.c.b16 %v1531, %v1529
  %v1632 = vpack.c.b16 %v1534, %v1532
  %v1633 = vpack.c.b16 %v1535, %v1533
  %v1634 = vpack.c.b16 %v1538, %v1536
  %v1635 = vpack.c.b16 %v1539, %v1537
  %v1636 = vpack.c.b16 %v1542, %v1540
  %v1637 = vpack.c.b16 %v1543, %v1541
  %v1638 = vpack.c.b16 %v1546, %v1544
  %v1639 = vpack.c.b16 %v1547, %v1545
  %v1640 = vpack.c.b16 %v1550, %v1548
  %v1641 = vpack.c.b16 %v1551, %v1549
  %v1642 = vpack.c.b16 %v1554, %v1552
  %v1643 = vpack.c.b16 %v1555, %v1553
  %v1644 = vpack.c.b16 %v1558, %v1556
  %v1645 = vpack.c.b16 %v1559, %v1557
  %v1646 = vpack.c.b16 %v1562, %v1560
  %v1647 = vpack.c.b16 %v1563, %v1561
  %v1648 = vpack.c.b16 %v1566, %v1564
  %v1649 = vpack.c.b16 %v1567, %v1565
  %v1650 = vpack.c.b16 %v1570, %v1568
  %v1651 = vpack.c.b16 %v1571, %v1569
  %v1652 = vpack.c.b16 %v1574, %v1572
  %v1653 = vpack.c.b16 %v1575, %v1573
  %v1654 = vpack.c.b16 %v1578, %v1576
  %v1655 = vpack.c.b16 %v1579, %v1577
  %v1656 = vpack.c.b16 %v1582, %v1580
  %v1657 = vpack.c.b16 %v1583, %v1581
  %v1658 = vpack.c.b16 %v1586, %v1584
  %v1659 = vpack.c.b16 %v1587, %v1585
  %v1660 = vpack.c.b16 %v1590, %v1588
  %v1661 = vpack.c.b16 %v1591, %v1589
  %v1662 = vpack.c.b16 %v1594, %v1592
  %v1663 = vpack.c.b16 %v1595, %v1593
  %v1664 = vpack.c.b16 %v1598, %v1596
  %v1665 = vpack.c.b16 %v1599, %v1597
  %v1666 = vpack.c.b16 %v1602, %v1600
  %v1667 = vpack.c.b16 %v1603, %v1601
  %1732 = vmatprep.subr.bf16.mxu0 %v1605
  %1733 = vmatpush1.bf16.msra.mxu0 %v1604
  %1734 = vmatprep.subr.bf16.mxu0 %v1607
  %1735 = vmatpush1.bf16.msra.mxu0 %v1606
  %1736 = vmatprep.subr.bf16.mxu0 %v1609
  %1737 = vmatpush1.bf16.msra.mxu0 %v1608
  %1738 = vmatprep.subr.bf16.mxu0 %v1611
  %1739 = vmatpush1.bf16.msra.mxu0 %v1610
  %1740 = vmatprep.subr.bf16.mxu0 %v1613
  %1741 = vmatpush1.bf16.msra.mxu0 %v1612
  %1742 = vmatprep.subr.bf16.mxu0 %v1615
  %1743 = vmatpush1.bf16.msra.mxu0 %v1614
  %1744 = vmatprep.subr.bf16.mxu0 %v1617
  %1745 = vmatpush1.bf16.msra.mxu0 %v1616
  %1746 = vmatprep.subr.bf16.mxu0 %v1619
  %1747 = vmatpush1.bf16.msra.mxu0 %v1618
  %1748 = vmatprep.subr.bf16.mxu0 %v1621
  %1749 = vmatpush1.bf16.msra.mxu0 %v1620
  %1750 = vmatprep.subr.bf16.mxu0 %v1623
  %1751 = vmatpush1.bf16.msra.mxu0 %v1622
  %1752 = vmatprep.subr.bf16.mxu0 %v1625
  %1753 = vmatpush1.bf16.msra.mxu0 %v1624
  %1754 = vmatprep.subr.bf16.mxu0 %v1627
  %1755 = vmatpush1.bf16.msra.mxu0 %v1626
  %1756 = vmatprep.subr.bf16.mxu0 %v1629
  %1757 = vmatpush1.bf16.msra.mxu0 %v1628
  %1758 = vmatprep.subr.bf16.mxu0 %v1631
  %1759 = vmatpush1.bf16.msra.mxu0 %v1630
  %1760 = vmatprep.subr.bf16.mxu0 %v1633
  %1761 = vmatpush1.bf16.msra.mxu0 %v1632
  %1762 = vmatprep.subr.bf16.mxu0 %v1635
  %1763 = vmatpush1.bf16.msra.mxu0 %v1634
  %1764 = vmatprep.mubr.bf16.mxu0 %v1396
  %1765 = vmatmul.mubr.bf16.gmra.mrb[0].mxu0 %v1395
  %v1766 = vpop.f32.mrb[0].mxu0
  %v1767 = vadd.f32 %v1405, %v1766
  %v1768 = vpop.f32.mrb[0].mxu0
  %v1769 = vadd.f32 %v1409, %v1768
  %v1770 = vpop.f32.mrb[0].mxu0
  %v1771 = vpop.f32.mrb[0].mxu0
  %1772 = vdwg.mxu0
  %1773 = vmatprep.subr.bf16.mxu0 %v1637
  %1774 = vmatpush1.bf16.msra.mxu0 %v1636
  %1775 = vmatprep.subr.bf16.mxu0 %v1639
  %1776 = vmatpush1.bf16.msra.mxu0 %v1638
  %1777 = vmatprep.subr.bf16.mxu0 %v1641
  %1778 = vmatpush1.bf16.msra.mxu0 %v1640
  %1779 = vmatprep.subr.bf16.mxu0 %v1643
  %1780 = vmatpush1.bf16.msra.mxu0 %v1642
  %1781 = vmatprep.subr.bf16.mxu0 %v1645
  %1782 = vmatpush1.bf16.msra.mxu0 %v1644
  %1783 = vmatprep.subr.bf16.mxu0 %v1647
  %1784 = vmatpush1.bf16.msra.mxu0 %v1646
  %1785 = vmatprep.subr.bf16.mxu0 %v1649
  %1786 = vmatpush1.bf16.msra.mxu0 %v1648
  %1787 = vmatprep.subr.bf16.mxu0 %v1651
  %1788 = vmatpush1.bf16.msra.mxu0 %v1650
  %1789 = vmatprep.subr.bf16.mxu0 %v1653
  %1790 = vmatpush1.bf16.msra.mxu0 %v1652
  %1791 = vmatprep.subr.bf16.mxu0 %v1655
  %1792 = vmatpush1.bf16.msra.mxu0 %v1654
  %1793 = vmatprep.subr.bf16.mxu0 %v1657
  %1794 = vmatpush1.bf16.msra.mxu0 %v1656
  %1795 = vmatprep.subr.bf16.mxu0 %v1659
  %1796 = vmatpush1.bf16.msra.mxu0 %v1658
  %1797 = vmatprep.subr.bf16.mxu0 %v1661
  %1798 = vmatpush1.bf16.msra.mxu0 %v1660
  %1799 = vmatprep.subr.bf16.mxu0 %v1663
  %1800 = vmatpush1.bf16.msra.mxu0 %v1662
  %1801 = vmatprep.subr.bf16.mxu0 %v1665
  %1802 = vmatpush1.bf16.msra.mxu0 %v1664
  %1803 = vmatprep.subr.bf16.mxu0 %v1667
  %1804 = vmatpush1.bf16.msra.mxu0 %v1666
  %1805 = vmatprep.mubr.bf16.mxu0 %v1398
  %1806 = vmatmul.mubr.bf16.gmra.mrb[0].mxu0 %v1397
  %v1807 = vpop.f32.mrb[0].mxu0
  %v1808 = vadd.f32 %v1767, %v1807
  %v1809 = vpop.f32.mrb[0].mxu0
  %v1810 = vadd.f32 %v1769, %v1809
  %v1811 = vpop.f32.mrb[0].mxu0
  %v1812 = vpop.f32.mrb[0].mxu0
  %1813 = vdwg.mxu0
  %v1814 = vmax.f32 %v1808, 0.0
  %v1815 = vmax.f32 %v1810, 0.0
  %v1816 = vld [vmem:[%s2 + $0x180] sm:$0xf]
  %v1817 = vld [vmem:[%s2 + $0x184] sm:$0xf]
  %v1818 = vld [vmem:[%s2 + $0x188] sm:$0xf]
  %v1819 = vld [vmem:[%s2 + $0x18c] sm:$0xf]
  %v1820 = vld [vmem:[%s2 + $0x190] sm:$0xf]
  %v1821 = vld [vmem:[%s2 + $0x194] sm:$0xf]
  %v1822 = vld [vmem:[%s2 + $0x198] sm:$0xf]
  %v1823 = vld [vmem:[%s2 + $0x19c] sm:$0xf]
  %v1824 = vld [vmem:[%s2 + $0x1a0] sm:$0xf]
  %v1825 = vld [vmem:[%s2 + $0x1a4] sm:$0xf]
  %v1826 = vld [vmem:[%s2 + $0x1a8] sm:$0xf]
  %v1827 = vld [vmem:[%s2 + $0x1ac] sm:$0xf]
  %v1828 = vld [vmem:[%s2 + $0x1b0] sm:$0xf]
  %v1829 = vld [vmem:[%s2 + $0x1b4] sm:$0xf]
  %v1830 = vld [vmem:[%s2 + $0x1b8] sm:$0xf]
  %v1831 = vld [vmem:[%s2 + $0x1bc] sm:$0xf]
  %v1832 = vld [vmem:[%s2 + $0x1c0] sm:$0xf]
  %v1833 = vld [vmem:[%s2 + $0x1c4] sm:$0xf]
  %v1834 = vld [vmem:[%s2 + $0x1c8] sm:$0xf]
  %v1835 = vld [vmem:[%s2 + $0x1cc] sm:$0xf]
  %v1836 = vld [vmem:[%s2 + $0x1d0] sm:$0xf]
  %v1837 = vld [vmem:[%s2 + $0x1d4] sm:$0xf]
  %v1838 = vld [vmem:[%s2 + $0x1d8] sm:$0xf]
  %v1839 = vld [vmem:[%s2 + $0x1dc] sm:$0xf]
  %v1840 = vld [vmem:[%s2 + $0x1e0] sm:$0xf]
  %v1841 = vld [vmem:[%s2 + $0x1e4] sm:$0xf]
  %v1842 = vld [vmem:[%s2 + $0x1e8] sm:$0xf]
  %v1843 = vld [vmem:[%s2 + $0x1ec] sm:$0xf]
  %v1844 = vld [vmem:[%s2 + $0x1f0] sm:$0xf]
  %v1845 = vld [vmem:[%s2 + $0x1f4] sm:$0xf]
  %v1846 = vld [vmem:[%s2 + $0x1f8] sm:$0xf]
  %v1847 = vld [vmem:[%s2 + $0x1fc] sm:$0xf]
  %v1848 = vpack.c.bf16 %v1814, %v1814
  %v1849 = vpack.c.bf16 %v1815, %v1815
  %v1850 = vld [vmem:[%s5 + $0x4] ss:$0 sm:$0xff]
  %v1883 = vunpack.c.l.b16 %v1816
  %v1884 = vunpack.c.l.b16 %v1817
  %v1885 = vunpack.c.l.b16 %v1818
  %v1886 = vunpack.c.l.b16 %v1819
  %v1887 = vunpack.c.l.b16 %v1820
  %v1888 = vunpack.c.l.b16 %v1821
  %v1889 = vunpack.c.l.b16 %v1822
  %v1890 = vunpack.c.l.b16 %v1823
  %v1891 = vunpack.c.l.b16 %v1824
  %v1892 = vunpack.c.l.b16 %v1825
  %v1893 = vunpack.c.l.b16 %v1826
  %v1894 = vunpack.c.l.b16 %v1827
  %v1895 = vunpack.c.l.b16 %v1828
  %v1896 = vunpack.c.l.b16 %v1829
  %v1897 = vunpack.c.l.b16 %v1830
  %v1898 = vunpack.c.l.b16 %v1831
  %v1899 = vunpack.c.l.b16 %v1832
  %v1900 = vunpack.c.l.b16 %v1833
  %v1901 = vunpack.c.l.b16 %v1834
  %v1902 = vunpack.c.l.b16 %v1835
  %v1903 = vunpack.c.l.b16 %v1836
  %v1904 = vunpack.c.l.b16 %v1837
  %v1905 = vunpack.c.l.b16 %v1838
  %v1906 = vunpack.c.l.b16 %v1839
  %v1907 = vunpack.c.l.b16 %v1840
  %v1908 = vunpack.c.l.b16 %v1841
  %v1909 = vunpack.c.l.b16 %v1842
  %v1910 = vunpack.c.l.b16 %v1843
  %v1911 = vunpack.c.l.b16 %v1844
  %v1912 = vunpack.c.l.b16 %v1845
  %v1913 = vunpack.c.l.b16 %v1846
  %v1914 = vunpack.c.l.b16 %v1847
  %v1915 = vpack.c.b16 %v1884, %v1883
  %v1916 = vpack.c.b16 %v1886, %v1885
  %v1917 = vpack.c.b16 %v1888, %v1887
  %v1918 = vpack.c.b16 %v1890, %v1889
  %v1919 = vpack.c.b16 %v1892, %v1891
  %v1920 = vpack.c.b16 %v1894, %v1893
  %v1921 = vpack.c.b16 %v1896, %v1895
  %v1922 = vpack.c.b16 %v1898, %v1897
  %v1923 = vpack.c.b16 %v1900, %v1899
  %v1924 = vpack.c.b16 %v1902, %v1901
  %v1925 = vpack.c.b16 %v1904, %v1903
  %v1926 = vpack.c.b16 %v1906, %v1905
  %v1927 = vpack.c.b16 %v1908, %v1907
  %v1928 = vpack.c.b16 %v1910, %v1909
  %v1929 = vpack.c.b16 %v1912, %v1911
  %v1930 = vpack.c.b16 %v1914, %v1913
  %1947 = vmatprep.subr.bf16.mxu0 0
  %1948 = vmatpush1.bf16.msra.mxu0 %v1915
  %1949 = vmatprep.subr.bf16.mxu0 0
  %1950 = vmatpush1.bf16.msra.mxu0 %v1916
  %1951 = vmatprep.subr.bf16.mxu0 0
  %1952 = vmatpush1.bf16.msra.mxu0 %v1917
  %1953 = vmatprep.subr.bf16.mxu0 0
  %1954 = vmatpush1.bf16.msra.mxu0 %v1918
  %1955 = vmatprep.subr.bf16.mxu0 0
  %1956 = vmatpush1.bf16.msra.mxu0 %v1919
  %1957 = vmatprep.subr.bf16.mxu0 0
  %1958 = vmatpush1.bf16.msra.mxu0 %v1920
  %1959 = vmatprep.subr.bf16.mxu0 0
  %1960 = vmatpush1.bf16.msra.mxu0 %v1921
  %1961 = vmatprep.subr.bf16.mxu0 0
  %1962 = vmatpush1.bf16.msra.mxu0 %v1922
  %1963 = vmatprep.subr.bf16.mxu0 0
  %1964 = vmatpush1.bf16.msra.mxu0 %v1923
  %1965 = vmatprep.subr.bf16.mxu0 0
  %1966 = vmatpush1.bf16.msra.mxu0 %v1924
  %1967 = vmatprep.subr.bf16.mxu0 0
  %1968 = vmatpush1.bf16.msra.mxu0 %v1925
  %1969 = vmatprep.subr.bf16.mxu0 0
  %1970 = vmatpush1.bf16.msra.mxu0 %v1926
  %1971 = vmatprep.subr.bf16.mxu0 0
  %1972 = vmatpush1.bf16.msra.mxu0 %v1927
  %1973 = vmatprep.subr.bf16.mxu0 0
  %1974 = vmatpush1.bf16.msra.mxu0 %v1928
  %1975 = vmatprep.subr.bf16.mxu0 0
  %1976 = vmatpush1.bf16.msra.mxu0 %v1929
  %1977 = vmatprep.subr.bf16.mxu0 0
  %1978 = vmatpush1.bf16.msra.mxu0 %v1930
  %1979 = vmatprep.mubr.bf16.mxu0 %v1849
  %1980 = vmatmul.mubr.bf16.gmra.mrb[0].mxu0 %v1848
  %v1981 = vpop.f32.mrb[0].mxu0
  %v1982 = vadd.f32 %v1850, %v1981
  %v1983 = vpop.f32.mrb[0].mxu0
  %v1984 = vpop.f32.mrb[0].mxu0
  %v1985 = vpop.f32.mrb[0].mxu0
  %1986 = vdwg.mxu0
  %v1987 = vmax.f32 %v1982, 0.0
  %v1988 = vld [vmem:[%s2 + $0x200] sm:$0xf]
  %v1989 = vld [vmem:[%s2 + $0x204] sm:$0xf]
  %v1990 = vld [vmem:[%s2 + $0x208] sm:$0xf]
  %v1991 = vld [vmem:[%s2 + $0x20c] sm:$0xf]
  %v1992 = vld [vmem:[%s2 + $0x210] sm:$0xf]
  %v1993 = vld [vmem:[%s2 + $0x214] sm:$0xf]
  %v1994 = vld [vmem:[%s2 + $0x218] sm:$0xf]
  %v1995 = vld [vmem:[%s2 + $0x21c] sm:$0xf]
  %v1996 = vld [vmem:[%s2 + $0x220] sm:$0xf]
  %v1997 = vld [vmem:[%s2 + $0x224] sm:$0xf]
  %v1998 = vld [vmem:[%s2 + $0x228] sm:$0xf]
  %v1999 = vld [vmem:[%s2 + $0x22c] sm:$0xf]
  %v2000 = vld [vmem:[%s2 + $0x230] sm:$0xf]
  %v2001 = vld [vmem:[%s2 + $0x234] sm:$0xf]
  %v2002 = vld [vmem:[%s2 + $0x238] sm:$0xf]
  %v2003 = vld [vmem:[%s2 + $0x23c] sm:$0xf]
  %v2004 = vpack.c.bf16 %v1987, %v1987
  %v2005 = vld [vmem:[%s5 + $0x5] ss:$0 sm:$0xff]
  %v2022 = vunpack.c.l.b16 %v1988
  %v2023 = vunpack.c.l.b16 %v1989
  %v2024 = vunpack.c.l.b16 %v1990
  %v2025 = vunpack.c.l.b16 %v1991
  %v2026 = vunpack.c.l.b16 %v1992
  %v2027 = vunpack.c.l.b16 %v1993
  %v2028 = vunpack.c.l.b16 %v1994
  %v2029 = vunpack.c.l.b16 %v1995
  %v2030 = vunpack.c.l.b16 %v1996
  %v2031 = vunpack.c.l.b16 %v1997
  %v2032 = vunpack.c.l.b16 %v1998
  %v2033 = vunpack.c.l.b16 %v1999
  %v2034 = vunpack.c.l.b16 %v2000
  %v2035 = vunpack.c.l.b16 %v2001
  %v2036 = vunpack.c.l.b16 %v2002
  %v2037 = vunpack.c.l.b16 %v2003
  %v2038 = vpack.c.b16 %v2023, %v2022
  %v2039 = vpack.c.b16 %v2025, %v2024
  %v2040 = vpack.c.b16 %v2027, %v2026
  %v2041 = vpack.c.b16 %v2029, %v2028
  %v2042 = vpack.c.b16 %v2031, %v2030
  %v2043 = vpack.c.b16 %v2033, %v2032
  %v2044 = vpack.c.b16 %v2035, %v2034
  %v2045 = vpack.c.b16 %v2037, %v2036
  %2054 = vmatprep.subr.bf16.mxu0 0
  %2055 = vmatpush1.bf16.msra.mxu0 %v2038
  %2056 = vmatprep.subr.bf16.mxu0 0
  %2057 = vmatpush1.bf16.msra.mxu0 %v2039
  %2058 = vmatprep.subr.bf16.mxu0 0
  %2059 = vmatpush1.bf16.msra.mxu0 %v2040
  %2060 = vmatprep.subr.bf16.mxu0 0
  %2061 = vmatpush1.bf16.msra.mxu0 %v2041
  %2062 = vmatprep.subr.bf16.mxu0 0
  %2063 = vmatpush1.bf16.msra.mxu0 %v2042
  %2064 = vmatprep.subr.bf16.mxu0 0
  %2065 = vmatpush1.bf16.msra.mxu0 %v2043
  %2066 = vmatprep.subr.bf16.mxu0 0
  %2067 = vmatpush1.bf16.msra.mxu0 %v2044
  %2068 = vmatprep.subr.bf16.mxu0 0
  %2069 = vmatpush1.bf16.msra.mxu0 %v2045
  %2070 = vmatprep.subr.bf16.mxu0 0
  %2071 = vmatpush1.bf16.msra.mxu0 0
  %2072 = vmatprep.subr.bf16.mxu0 0
  %2073 = vmatpush1.bf16.msra.mxu0 0
  %2074 = vmatprep.subr.bf16.mxu0 0
  %2075 = vmatpush1.bf16.msra.mxu0 0
  %2076 = vmatprep.subr.bf16.mxu0 0
  %2077 = vmatpush1.bf16.msra.mxu0 0
  %2078 = vmatprep.subr.bf16.mxu0 0
  %2079 = vmatpush1.bf16.msra.mxu0 0
  %2080 = vmatprep.subr.bf16.mxu0 0
  %2081 = vmatpush1.bf16.msra.mxu0 0
  %2082 = vmatprep.subr.bf16.mxu0 0
  %2083 = vmatpush1.bf16.msra.mxu0 0
  %2084 = vmatprep.subr.bf16.mxu0 0
  %2085 = vmatpush1.bf16.msra.mxu0 0
  %2086 = vmatprep.mubr.bf16.mxu0 0
  %2087 = vmatmul.mubr.bf16.gmra.mrb[0].mxu0 %v2004
  %v2088 = vpop.f32.mrb[0].mxu0
  %v2089 = vadd.f32 %v2005, %v2088
  %v2090 = vpop.f32.mrb[0].mxu0
  %v2091 = vpop.f32.mrb[0].mxu0
  %v2092 = vpop.f32.mrb[0].mxu0
  %2093 = vdwg.mxu0
  %v2094 = vmax.f32 %v2089, 0.0
  %v2095 = vld [vmem:[%s2 + $0x240] sm:$0xf]
  %v2096 = vld [vmem:[%s2 + $0x244] sm:$0xf]
  %v2097 = vld [vmem:[%s2 + $0x248] sm:$0xf]
  %v2098 = vld [vmem:[%s2 + $0x24c] sm:$0xf]
  %v2099 = vld [vmem:[%s2 + $0x250] sm:$0xf]
  %v2100 = vld [vmem:[%s2 + $0x254] sm:$0xf]
  %v2101 = vld [vmem:[%s2 + $0x258] sm:$0xf]
  %v2102 = vld [vmem:[%s2 + $0x25c] sm:$0xf]
  %v2103 = vld [vmem:[%s2 + $0x260] sm:$0xf]
  %v2104 = vld [vmem:[%s2 + $0x264] sm:$0xf]
  %v2105 = vld [vmem:[%s2 + $0x268] sm:$0xf]
  %v2106 = vld [vmem:[%s2 + $0x26c] sm:$0xf]
  %v2107 = vld [vmem:[%s2 + $0x270] sm:$0xf]
  %v2108 = vld [vmem:[%s2 + $0x274] sm:$0xf]
  %v2109 = vld [vmem:[%s2 + $0x278] sm:$0xf]
  %v2110 = vld [vmem:[%s2 + $0x27c] sm:$0xf]
  %v2111 = vpack.c.bf16 %v2094, %v2094
  %v2112 = vld [vmem:[%s5 + $0x6] ss:$0 sm:$0xff]
  %v2129 = vunpack.c.l.b16 %v2095
  %v2130 = vunpack.c.l.b16 %v2096
  %v2131 = vunpack.c.l.b16 %v2097
  %v2132 = vunpack.c.l.b16 %v2098
  %v2133 = vunpack.c.l.b16 %v2099
  %v2134 = vunpack.c.l.b16 %v2100
  %v2135 = vunpack.c.l.b16 %v2101
  %v2136 = vunpack.c.l.b16 %v2102
  %v2137 = vunpack.c.l.b16 %v2103
  %v2138 = vunpack.c.l.b16 %v2104
  %v2139 = vunpack.c.l.b16 %v2105
  %v2140 = vunpack.c.l.b16 %v2106
  %v2141 = vunpack.c.l.b16 %v2107
  %v2142 = vunpack.c.l.b16 %v2108
  %v2143 = vunpack.c.l.b16 %v2109
  %v2144 = vunpack.c.l.b16 %v2110
  %v2145 = vpack.c.b16 %v2130, %v2129
  %v2146 = vpack.c.b16 %v2132, %v2131
  %v2147 = vpack.c.b16 %v2134, %v2133
  %v2148 = vpack.c.b16 %v2136, %v2135
  %v2149 = vpack.c.b16 %v2138, %v2137
  %v2150 = vpack.c.b16 %v2140, %v2139
  %v2151 = vpack.c.b16 %v2142, %v2141
  %v2152 = vpack.c.b16 %v2144, %v2143
  %2161 = vmatprep.subr.bf16.mxu0 0
  %2162 = vmatpush1.bf16.msra.mxu0 %v2145
  %2163 = vmatprep.subr.bf16.mxu0 0
  %2164 = vmatpush1.bf16.msra.mxu0 %v2146
  %2165 = vmatprep.subr.bf16.mxu0 0
  %2166 = vmatpush1.bf16.msra.mxu0 %v2147
  %2167 = vmatprep.subr.bf16.mxu0 0
  %2168 = vmatpush1.bf16.msra.mxu0 %v2148
  %2169 = vmatprep.subr.bf16.mxu0 0
  %2170 = vmatpush1.bf16.msra.mxu0 %v2149
  %2171 = vmatprep.subr.bf16.mxu0 0
  %2172 = vmatpush1.bf16.msra.mxu0 %v2150
  %2173 = vmatprep.subr.bf16.mxu0 0
  %2174 = vmatpush1.bf16.msra.mxu0 %v2151
  %2175 = vmatprep.subr.bf16.mxu0 0
  %2176 = vmatpush1.bf16.msra.mxu0 %v2152
  %2177 = vmatprep.subr.bf16.mxu0 0
  %2178 = vmatpush1.bf16.msra.mxu0 0
  %2179 = vmatprep.subr.bf16.mxu0 0
  %2180 = vmatpush1.bf16.msra.mxu0 0
  %2181 = vmatprep.subr.bf16.mxu0 0
  %2182 = vmatpush1.bf16.msra.mxu0 0
  %2183 = vmatprep.subr.bf16.mxu0 0
  %2184 = vmatpush1.bf16.msra.mxu0 0
  %2185 = vmatprep.subr.bf16.mxu0 0
  %2186 = vmatpush1.bf16.msra.mxu0 0
  %2187 = vmatprep.subr.bf16.mxu0 0
  %2188 = vmatpush1.bf16.msra.mxu0 0
  %2189 = vmatprep.subr.bf16.mxu0 0
  %2190 = vmatpush1.bf16.msra.mxu0 0
  %2191 = vmatprep.subr.bf16.mxu0 0
  %2192 = vmatpush1.bf16.msra.mxu0 0
  %2193 = vmatprep.mubr.bf16.mxu0 0
  %2194 = vmatmul.mubr.bf16.gmra.mrb[0].mxu0 %v2111
  %v2195 = vpop.f32.mrb[0].mxu0
  %v2196 = vadd.f32 %v2112, %v2195
  %v2197 = vpop.f32.mrb[0].mxu0
  %v2198 = vpop.f32.mrb[0].mxu0
  %v2199 = vpop.f32.mrb[0].mxu0
  %2200 = vdwg.mxu0
  %2201 = vst [vmem:[%s6] sm:$0xff] %v2196
  // Predicated region
  $region26: #{transmlp_forward.1} parent=0 // pred_check
    _
  $region27: #{transmlp_forward.1} parent=0 // pred_check_branch
    %2203 = sbr.rel (0) target = $region29
  $region28: #{transmlp_forward.1} parent=0 // pred_region
    _
  $region29: #{transmlp_forward.1} parent=0 // pred_fallthru
    _
  // Predicated region
  $region30: #{transmlp_forward.1} parent=0 // pred_check
    _
  $region31: #{transmlp_forward.1} parent=0 // pred_check_branch
    %2205 = sbr.rel (0) target = $region33
  $region32: #{transmlp_forward.1} parent=0 // pred_region
    _
  $region33: #{transmlp_forward.1} parent=0 // pred_fallthru
    _

</llo_original>
